<compile_context>
chip_gen: v6e
topology: v6e:2x2x1
jax: 0.10.0
libtpu: 0.0.40
codegen_flags: <defaults>
</compile_context>

<pallas_src>
import jax
import jax.numpy as jnp
from jax.experimental import pallas as pl
from jax.experimental.pallas import tpu as pltpu


# ----------------------------------------------------------------------------
# Fused kernel: all layers + time loop + fc head in one pallas_call.
# PyTorch GRU gate order (r, z, n):
#   r = sigmoid(Wir x + bir + Whr h + bhr)
#   z = sigmoid(Wiz x + biz + Whz h + bhz)
#   n = tanh  (Win x + bin + r * (Whn h + bhn))
#   h' = (1 - z) * n + z * h          ==  n + z * (h - n)
# ----------------------------------------------------------------------------
def make_fused_gru_kernel(num_layers, seq_len, batch_pad, hidden):
    n_w = 4 * num_layers          # (w_ih, w_hh, bias_gi, b_hn) per layer
    H = hidden
    H2 = 2 * hidden

    def kernel(*refs):
        x_ref = refs[0]                       # (T*B_pad, input_size)  bf16
        w_refs = refs[1:1 + n_w]
        fcw_ref = refs[1 + n_w]               # (H, O)  bf16
        fcb_ref = refs[2 + n_w]               # (1, O)  f32
        out_ref = refs[3 + n_w]               # (B_pad, O)  f32
        seq_scr = refs[4 + n_w]               # (T*B_pad, H)  f32 VMEM scratch

        seq = x_ref[...]                      # current layer input (bf16)
        h = jnp.zeros((batch_pad, H), jnp.float32)

        for layer in range(num_layers):
            wih = w_refs[4 * layer + 0][...]  # (in_dim, 3H)  bf16, cols r|z|n
            whh = w_refs[4 * layer + 1][...]  # (H, 3H)       bf16, cols r|z|n
            b_gi = w_refs[4 * layer + 2][...]   # (1, 3H) f32: r/z folded, n=b_in
            b_hn = w_refs[4 * layer + 3][...]   # (1, H)  f32

            # --- Hoisted input projection: ONE fused matmul per layer, biases
            #     pre-folded (b_ih + b_hh for r/z, b_ih only for n). ---
            gi = jnp.dot(seq, wih, preferred_element_type=jnp.float32) + b_gi

            # Hoist the b_hn broadcast out of the unrolled time loop.
            b_hn_b = jnp.broadcast_to(b_hn, (batch_pad, H))

            h = jnp.zeros((batch_pad, H), jnp.float32)   # h0 = 0 per layer
            last_layer = (layer + 1 == num_layers)

            # Serial recurrence (statically unrolled: T is small & static).
            for t in range(seq_len):
                lo = t * batch_pad                       # multiple of 8 -> aligned
                gi_t = gi[lo:lo + batch_pad]             # (B_pad, 3H)
                gh = jnp.dot(h.astype(jnp.bfloat16), whh,
                             preferred_element_type=jnp.float32)  # (B_pad, 3H)
                rz = jax.nn.sigmoid(gi_t[:, :H2] + gh[:, :H2])    # one EUP slab
                r = rz[:, :H]
                z = rz[:, H:]
                n = jnp.tanh(gi_t[:, H2:] + r * (gh[:, H2:] + b_hn_b))
                h = n + z * (h - n)
                if not last_layer:
                    # Layers feeding another GRU layer materialize their full
                    # sequence only in VMEM (never HBM), tile-aligned writes.
                    seq_scr[lo:lo + batch_pad, :] = h

            if not last_layer:
                seq = seq_scr[...].astype(jnp.bfloat16)  # (T*B_pad, H)

        # Fused fc head on the last timestep's hidden state.
        out_ref[...] = (jnp.dot(h.astype(jnp.bfloat16), fcw_ref[...],
                                preferred_element_type=jnp.float32)
                        + fcb_ref[...]).astype(out_ref.dtype)

    return kernel


# ----------------------------------------------------------------------------
# Wrapper: batch-first (B, T, I) input, one pallas_call for the whole model.
# ----------------------------------------------------------------------------
@jax.jit
def gru_model_forward(x, params):
    B, T, I = x.shape
    layers = params["gru_layers"]
    num_layers = len(layers)
    H = layers[0]["w_hh"].shape[0]
    O = params["fc_w_t"].shape[-1]
    B_pad = ((B + 7) // 8) * 8                # pad batch to the sublane tile

    # (B, T, I) -> time-major (T, B_pad, I) -> flat (T*B_pad, I); row = t*B_pad + b.
    xt = jnp.transpose(x, (1, 0, 2))
    if B_pad != B:
        xt = jnp.pad(xt, ((0, 0), (0, B_pad - B), (0, 0)))
    x_flat = xt.reshape(T * B_pad, I).astype(jnp.bfloat16)

    args = [x_flat]
    for layer in layers:
        args += [layer["w_ih"], layer["w_hh"], layer["bias_gi"], layer["b_hn"]]
    args += [params["fc_w_t"], params["fc_b"]]

    kernel = make_fused_gru_kernel(num_layers, T, B_pad, H)
    out = pl.pallas_call(
        kernel,
        out_shape=jax.ShapeDtypeStruct((B_pad, O), jnp.float32),
        scratch_shapes=[pltpu.VMEM((T * B_pad, H), jnp.float32)],
    )(*args)
    return out[:B]


# ----------------------------------------------------------------------------
# Deterministic parameter init (same distributions/shapes as nn.GRU/nn.Linear).
# Returns (kernel-layout params, raw torch-layout params for the reference).
# ----------------------------------------------------------------------------
def init_params(key, input_size, hidden_size, num_layers, output_size):
    H = hidden_size
    bound = 1.0 / (H ** 0.5)
    raw_layers, kern_layers = [], []
    for layer_idx in range(num_layers):
        in_dim = input_size if layer_idx == 0 else H
        key, k1, k2, k3, k4 = jax.random.split(key, 5)
        w_ih = jax.random.uniform(k1, (3 * H, in_dim),
                                  minval=-bound, maxval=bound, dtype=jnp.float32)
        w_hh = jax.random.uniform(k2, (3 * H, H),
                                  minval=-bound, maxval=bound, dtype=jnp.float32)
        b_ih = jax.random.uniform(k3, (3 * H,),
                                  minval=-bound, maxval=bound, dtype=jnp.float32)
        b_hh = jax.random.uniform(k4, (3 * H,),
                                  minval=-bound, maxval=bound, dtype=jnp.float32)
        raw_layers.append({"w_ih": w_ih, "w_hh": w_hh, "b_ih": b_ih, "b_hh": b_hh})

        # Kernel layout: fused transposed weights (cols r|z|n), pre-folded
        # biases, bf16 MXU operands.
        bias_gi = jnp.concatenate(
            [b_ih[:2 * H] + b_hh[:2 * H],   # r, z: b_ih + b_hh
             b_ih[2 * H:]]).reshape(1, 3 * H)   # n: b_ih only
        kern_layers.append({
            "w_ih": w_ih.T.astype(jnp.bfloat16),        # (in_dim, 3H)
            "w_hh": w_hh.T.astype(jnp.bfloat16),        # (H, 3H)
            "bias_gi": bias_gi,                         # (1, 3H) f32
            "b_hn": b_hh[2 * H:].reshape(1, H),         # (1, H)  f32
        })

    key, k5, k6 = jax.random.split(key, 3)
    fc_w = jax.random.uniform(k5, (output_size, H),
                              minval=-bound, maxval=bound, dtype=jnp.float32)
    fc_b = jax.random.uniform(k6, (output_size,),
                              minval=-bound, maxval=bound, dtype=jnp.float32)

    kern_params = {"gru_layers": kern_layers,
                   "fc_w_t": fc_w.T.astype(jnp.bfloat16),   # (H, O)
                   "fc_b": fc_b.reshape(1, -1)}             # (1, O) f32
    raw_params = {"gru_layers": raw_layers, "fc_w": fc_w, "fc_b": fc_b}
    return kern_params, raw_params


# ----------------------------------------------------------------------------
# Pure-JAX f32 reference (mirrors torch.nn.GRU semantics, torch weight layout).
# ----------------------------------------------------------------------------
def reference_forward(x, raw):
    B, T, _ = x.shape
    seq = x
    for layer in raw["gru_layers"]:
        w_ih, w_hh = layer["w_ih"], layer["w_hh"]
        b_ih, b_hh = layer["b_ih"], layer["b_hh"]
        H = w_hh.shape[1]
        h = jnp.zeros((B, H), jnp.float32)
        outs = []
        for t in range(T):
            gi = seq[:, t, :] @ w_ih.T + b_ih
            gh = h @ w_hh.T + b_hh
            r = jax.nn.sigmoid(gi[:, :H] + gh[:, :H])
            z = jax.nn.sigmoid(gi[:, H:2 * H] + gh[:, H:2 * H])
            n = jnp.tanh(gi[:, 2 * H:] + r * gh[:, 2 * H:])
            h = (1.0 - z) * n + z * h
            outs.append(h)
        seq = jnp.stack(outs, axis=1)
    return seq[:, -1, :] @ raw["fc_w"].T + raw["fc_b"]


if __name__ == "__main__":
    # Small shapes consistent with the module's forward.
    batch, seq_len = 4, 8
    input_size, hidden_size, num_layers, output_size = 8, 32, 2, 8

    key = jax.random.PRNGKey(0)
    key_x, key_p = jax.random.split(key)
    x = jax.random.normal(key_x, (batch, seq_len, input_size), dtype=jnp.float32)
    kern_params, raw_params = init_params(key_p, input_size, hidden_size,
                                          num_layers, output_size)

    out = gru_model_forward(x, kern_params)
    out = jax.block_until_ready(out)

    ref = reference_forward(x, raw_params)
    assert out.shape == (batch, output_size)
    # bf16 MXU operands (same effective matmul precision as TPU default for
    # f32) vs. a pure-f32 reference -> slightly loosened tolerance.
    assert jnp.allclose(out, ref, atol=2e-2, rtol=2e-2), "mismatch vs reference"

    print("KERNEL_OK")
</pallas_src>

<mosaic_0001>
module attributes {stable_mosaic.version = 11 : i64} {
  func.func @kernel(%arg0: memref<64x8xbf16, #tpu.memory_space<vmem>>, %arg1: memref<8x96xbf16, #tpu.memory_space<vmem>>, %arg2: memref<32x96xbf16, #tpu.memory_space<vmem>>, %arg3: memref<1x96xf32, #tpu.memory_space<vmem>>, %arg4: memref<1x32xf32, #tpu.memory_space<vmem>>, %arg5: memref<32x96xbf16, #tpu.memory_space<vmem>>, %arg6: memref<32x96xbf16, #tpu.memory_space<vmem>>, %arg7: memref<1x96xf32, #tpu.memory_space<vmem>>, %arg8: memref<1x32xf32, #tpu.memory_space<vmem>>, %arg9: memref<32x8xbf16, #tpu.memory_space<vmem>>, %arg10: memref<1x8xf32, #tpu.memory_space<vmem>>, %arg11: memref<8x8xf32, #tpu.memory_space<vmem>>, %arg12: memref<64x32xf32, #tpu.memory_space<vmem>>) attributes {dimension_semantics = [], scalar_prefetch = 0 : i64, scratch_operands = 1 : i64, tpu.core_type = #tpu.core_type<tc>} {
    %c0 = arith.constant 0 : index
    %c0_0 = arith.constant 0 : index
    %0 = vector.load %arg0[%c0, %c0_0] : memref<64x8xbf16, #tpu.memory_space<vmem>>, vector<64x8xbf16>
    %c0_1 = arith.constant 0 : index
    %c0_2 = arith.constant 0 : index
    %1 = vector.load %arg1[%c0_1, %c0_2] : memref<8x96xbf16, #tpu.memory_space<vmem>>, vector<8x96xbf16>
    %c0_3 = arith.constant 0 : index
    %c0_4 = arith.constant 0 : index
    %2 = vector.load %arg2[%c0_3, %c0_4] : memref<32x96xbf16, #tpu.memory_space<vmem>>, vector<32x96xbf16>
    %c0_5 = arith.constant 0 : index
    %c0_6 = arith.constant 0 : index
    %3 = vector.load %arg3[%c0_5, %c0_6] : memref<1x96xf32, #tpu.memory_space<vmem>>, vector<1x96xf32>
    %c0_7 = arith.constant 0 : index
    %c0_8 = arith.constant 0 : index
    %4 = vector.load %arg4[%c0_7, %c0_8] : memref<1x32xf32, #tpu.memory_space<vmem>>, vector<1x32xf32>
    %cst = arith.constant dense<0.000000e+00> : vector<64x96xf32>
    %5 = tpu.matmul %0, %1, %cst {dimension_numbers = #tpu.dot_dimension_numbers<[1], [0], [0], [1], [0, 0, 1, 1], [], []>} : vector<64x8xbf16>, vector<8x96xbf16>, vector<64x96xf32> -> vector<64x96xf32>
    %6 = vector.broadcast %3 : vector<1x96xf32> to vector<64x96xf32>
    %7 = arith.addf %5, %6 : vector<64x96xf32>
    %8 = vector.shape_cast %4 : vector<1x32xf32> to vector<1x32xf32>
    %9 = vector.broadcast %8 : vector<1x32xf32> to vector<8x32xf32>
    %cst_9 = arith.constant 0.000000e+00 : f32
    %10 = vector.broadcast %cst_9 : f32 to vector<8x32xf32>
    %11 = vector.extract_strided_slice %7 {offsets = [0, 0], sizes = [8, 96], strides = [1, 1]} : vector<64x96xf32> to vector<8x96xf32>
    %12 = arith.truncf %10 : vector<8x32xf32> to vector<8x32xbf16>
    %cst_10 = arith.constant dense<0.000000e+00> : vector<8x96xf32>
    %13 = tpu.matmul %12, %2, %cst_10 {dimension_numbers = #tpu.dot_dimension_numbers<[1], [0], [0], [1], [0, 0, 1, 1], [], []>} : vector<8x32xbf16>, vector<32x96xbf16>, vector<8x96xf32> -> vector<8x96xf32>
    %14 = vector.extract_strided_slice %11 {offsets = [0, 0], sizes = [8, 64], strides = [1, 1]} : vector<8x96xf32> to vector<8x64xf32>
    %15 = vector.extract_strided_slice %13 {offsets = [0, 0], sizes = [8, 64], strides = [1, 1]} : vector<8x96xf32> to vector<8x64xf32>
    %16 = arith.addf %14, %15 : vector<8x64xf32>
    %17 = arith.negf %16 : vector<8x64xf32>
    %18 = math.exp %17 : vector<8x64xf32>
    %cst_11 = arith.constant 1.000000e+00 : f32
    %19 = vector.broadcast %cst_11 : f32 to vector<8x64xf32>
    %20 = arith.addf %19, %18 : vector<8x64xf32>
    %21 = arith.divf %19, %20 : vector<8x64xf32>
    %22 = vector.extract_strided_slice %21 {offsets = [0, 0], sizes = [8, 32], strides = [1, 1]} : vector<8x64xf32> to vector<8x32xf32>
    %23 = vector.extract_strided_slice %21 {offsets = [0, 32], sizes = [8, 32], strides = [1, 1]} : vector<8x64xf32> to vector<8x32xf32>
    %24 = vector.extract_strided_slice %11 {offsets = [0, 64], sizes = [8, 32], strides = [1, 1]} : vector<8x96xf32> to vector<8x32xf32>
    %25 = vector.extract_strided_slice %13 {offsets = [0, 64], sizes = [8, 32], strides = [1, 1]} : vector<8x96xf32> to vector<8x32xf32>
    %26 = arith.addf %25, %9 : vector<8x32xf32>
    %27 = arith.mulf %22, %26 : vector<8x32xf32>
    %28 = arith.addf %24, %27 : vector<8x32xf32>
    %29 = math.tanh %28 : vector<8x32xf32>
    %30 = arith.subf %10, %29 : vector<8x32xf32>
    %31 = arith.mulf %23, %30 : vector<8x32xf32>
    %32 = arith.addf %29, %31 : vector<8x32xf32>
    %c0_12 = arith.constant 0 : index
    %c0_13 = arith.constant 0 : index
    %33 = vector.load %arg12[%c0_12, %c0_13] : memref<64x32xf32, #tpu.memory_space<vmem>>, vector<8x32xf32>
    tpu.vector_store %arg12[%c0_12, %c0_13], %32 {strides = array<i32>} : memref<64x32xf32, #tpu.memory_space<vmem>>, vector<8x32xf32>,
    %34 = vector.extract_strided_slice %7 {offsets = [8, 0], sizes = [8, 96], strides = [1, 1]} : vector<64x96xf32> to vector<8x96xf32>
    %35 = arith.truncf %32 : vector<8x32xf32> to vector<8x32xbf16>
    %cst_14 = arith.constant dense<0.000000e+00> : vector<8x96xf32>
    %36 = tpu.matmul %35, %2, %cst_14 {dimension_numbers = #tpu.dot_dimension_numbers<[1], [0], [0], [1], [0, 0, 1, 1], [], []>} : vector<8x32xbf16>, vector<32x96xbf16>, vector<8x96xf32> -> vector<8x96xf32>
    %37 = vector.extract_strided_slice %34 {offsets = [0, 0], sizes = [8, 64], strides = [1, 1]} : vector<8x96xf32> to vector<8x64xf32>
    %38 = vector.extract_strided_slice %36 {offsets = [0, 0], sizes = [8, 64], strides = [1, 1]} : vector<8x96xf32> to vector<8x64xf32>
    %39 = arith.addf %37, %38 : vector<8x64xf32>
    %40 = arith.negf %39 : vector<8x64xf32>
    %41 = math.exp %40 : vector<8x64xf32>
    %cst_15 = arith.constant 1.000000e+00 : f32
    %42 = vector.broadcast %cst_15 : f32 to vector<8x64xf32>
    %43 = arith.addf %42, %41 : vector<8x64xf32>
    %44 = arith.divf %42, %43 : vector<8x64xf32>
    %45 = vector.extract_strided_slice %44 {offsets = [0, 0], sizes = [8, 32], strides = [1, 1]} : vector<8x64xf32> to vector<8x32xf32>
    %46 = vector.extract_strided_slice %44 {offsets = [0, 32], sizes = [8, 32], strides = [1, 1]} : vector<8x64xf32> to vector<8x32xf32>
    %47 = vector.extract_strided_slice %34 {offsets = [0, 64], sizes = [8, 32], strides = [1, 1]} : vector<8x96xf32> to vector<8x32xf32>
    %48 = vector.extract_strided_slice %36 {offsets = [0, 64], sizes = [8, 32], strides = [1, 1]} : vector<8x96xf32> to vector<8x32xf32>
    %49 = arith.addf %48, %9 : vector<8x32xf32>
    %50 = arith.mulf %45, %49 : vector<8x32xf32>
    %51 = arith.addf %47, %50 : vector<8x32xf32>
    %52 = math.tanh %51 : vector<8x32xf32>
    %53 = arith.subf %32, %52 : vector<8x32xf32>
    %54 = arith.mulf %46, %53 : vector<8x32xf32>
    %55 = arith.addf %52, %54 : vector<8x32xf32>
    %c8 = arith.constant 8 : index
    %c0_16 = arith.constant 0 : index
    %56 = vector.load %arg12[%c8, %c0_16] : memref<64x32xf32, #tpu.memory_space<vmem>>, vector<8x32xf32>
    tpu.vector_store %arg12[%c8, %c0_16], %55 {strides = array<i32>} : memref<64x32xf32, #tpu.memory_space<vmem>>, vector<8x32xf32>,
    %57 = vector.extract_strided_slice %7 {offsets = [16, 0], sizes = [8, 96], strides = [1, 1]} : vector<64x96xf32> to vector<8x96xf32>
    %58 = arith.truncf %55 : vector<8x32xf32> to vector<8x32xbf16>
    %cst_17 = arith.constant dense<0.000000e+00> : vector<8x96xf32>
    %59 = tpu.matmul %58, %2, %cst_17 {dimension_numbers = #tpu.dot_dimension_numbers<[1], [0], [0], [1], [0, 0, 1, 1], [], []>} : vector<8x32xbf16>, vector<32x96xbf16>, vector<8x96xf32> -> vector<8x96xf32>
    %60 = vector.extract_strided_slice %57 {offsets = [0, 0], sizes = [8, 64], strides = [1, 1]} : vector<8x96xf32> to vector<8x64xf32>
    %61 = vector.extract_strided_slice %59 {offsets = [0, 0], sizes = [8, 64], strides = [1, 1]} : vector<8x96xf32> to vector<8x64xf32>
    %62 = arith.addf %60, %61 : vector<8x64xf32>
    %63 = arith.negf %62 : vector<8x64xf32>
    %64 = math.exp %63 : vector<8x64xf32>
    %cst_18 = arith.constant 1.000000e+00 : f32
    %65 = vector.broadcast %cst_18 : f32 to vector<8x64xf32>
    %66 = arith.addf %65, %64 : vector<8x64xf32>
    %67 = arith.divf %65, %66 : vector<8x64xf32>
    %68 = vector.extract_strided_slice %67 {offsets = [0, 0], sizes = [8, 32], strides = [1, 1]} : vector<8x64xf32> to vector<8x32xf32>
    %69 = vector.extract_strided_slice %67 {offsets = [0, 32], sizes = [8, 32], strides = [1, 1]} : vector<8x64xf32> to vector<8x32xf32>
    %70 = vector.extract_strided_slice %57 {offsets = [0, 64], sizes = [8, 32], strides = [1, 1]} : vector<8x96xf32> to vector<8x32xf32>
    %71 = vector.extract_strided_slice %59 {offsets = [0, 64], sizes = [8, 32], strides = [1, 1]} : vector<8x96xf32> to vector<8x32xf32>
    %72 = arith.addf %71, %9 : vector<8x32xf32>
    %73 = arith.mulf %68, %72 : vector<8x32xf32>
    %74 = arith.addf %70, %73 : vector<8x32xf32>
    %75 = math.tanh %74 : vector<8x32xf32>
    %76 = arith.subf %55, %75 : vector<8x32xf32>
    %77 = arith.mulf %69, %76 : vector<8x32xf32>
    %78 = arith.addf %75, %77 : vector<8x32xf32>
    %c16 = arith.constant 16 : index
    %c0_19 = arith.constant 0 : index
    %79 = vector.load %arg12[%c16, %c0_19] : memref<64x32xf32, #tpu.memory_space<vmem>>, vector<8x32xf32>
    tpu.vector_store %arg12[%c16, %c0_19], %78 {strides = array<i32>} : memref<64x32xf32, #tpu.memory_space<vmem>>, vector<8x32xf32>,
    %80 = vector.extract_strided_slice %7 {offsets = [24, 0], sizes = [8, 96], strides = [1, 1]} : vector<64x96xf32> to vector<8x96xf32>
    %81 = arith.truncf %78 : vector<8x32xf32> to vector<8x32xbf16>
    %cst_20 = arith.constant dense<0.000000e+00> : vector<8x96xf32>
    %82 = tpu.matmul %81, %2, %cst_20 {dimension_numbers = #tpu.dot_dimension_numbers<[1], [0], [0], [1], [0, 0, 1, 1], [], []>} : vector<8x32xbf16>, vector<32x96xbf16>, vector<8x96xf32> -> vector<8x96xf32>
    %83 = vector.extract_strided_slice %80 {offsets = [0, 0], sizes = [8, 64], strides = [1, 1]} : vector<8x96xf32> to vector<8x64xf32>
    %84 = vector.extract_strided_slice %82 {offsets = [0, 0], sizes = [8, 64], strides = [1, 1]} : vector<8x96xf32> to vector<8x64xf32>
    %85 = arith.addf %83, %84 : vector<8x64xf32>
    %86 = arith.negf %85 : vector<8x64xf32>
    %87 = math.exp %86 : vector<8x64xf32>
    %cst_21 = arith.constant 1.000000e+00 : f32
    %88 = vector.broadcast %cst_21 : f32 to vector<8x64xf32>
    %89 = arith.addf %88, %87 : vector<8x64xf32>
    %90 = arith.divf %88, %89 : vector<8x64xf32>
    %91 = vector.extract_strided_slice %90 {offsets = [0, 0], sizes = [8, 32], strides = [1, 1]} : vector<8x64xf32> to vector<8x32xf32>
    %92 = vector.extract_strided_slice %90 {offsets = [0, 32], sizes = [8, 32], strides = [1, 1]} : vector<8x64xf32> to vector<8x32xf32>
    %93 = vector.extract_strided_slice %80 {offsets = [0, 64], sizes = [8, 32], strides = [1, 1]} : vector<8x96xf32> to vector<8x32xf32>
    %94 = vector.extract_strided_slice %82 {offsets = [0, 64], sizes = [8, 32], strides = [1, 1]} : vector<8x96xf32> to vector<8x32xf32>
    %95 = arith.addf %94, %9 : vector<8x32xf32>
    %96 = arith.mulf %91, %95 : vector<8x32xf32>
    %97 = arith.addf %93, %96 : vector<8x32xf32>
    %98 = math.tanh %97 : vector<8x32xf32>
    %99 = arith.subf %78, %98 : vector<8x32xf32>
    %100 = arith.mulf %92, %99 : vector<8x32xf32>
    %101 = arith.addf %98, %100 : vector<8x32xf32>
    %c24 = arith.constant 24 : index
    %c0_22 = arith.constant 0 : index
    %102 = vector.load %arg12[%c24, %c0_22] : memref<64x32xf32, #tpu.memory_space<vmem>>, vector<8x32xf32>
    tpu.vector_store %arg12[%c24, %c0_22], %101 {strides = array<i32>} : memref<64x32xf32, #tpu.memory_space<vmem>>, vector<8x32xf32>,
    %103 = vector.extract_strided_slice %7 {offsets = [32, 0], sizes = [8, 96], strides = [1, 1]} : vector<64x96xf32> to vector<8x96xf32>
    %104 = arith.truncf %101 : vector<8x32xf32> to vector<8x32xbf16>
    %cst_23 = arith.constant dense<0.000000e+00> : vector<8x96xf32>
    %105 = tpu.matmul %104, %2, %cst_23 {dimension_numbers = #tpu.dot_dimension_numbers<[1], [0], [0], [1], [0, 0, 1, 1], [], []>} : vector<8x32xbf16>, vector<32x96xbf16>, vector<8x96xf32> -> vector<8x96xf32>
    %106 = vector.extract_strided_slice %103 {offsets = [0, 0], sizes = [8, 64], strides = [1, 1]} : vector<8x96xf32> to vector<8x64xf32>
    %107 = vector.extract_strided_slice %105 {offsets = [0, 0], sizes = [8, 64], strides = [1, 1]} : vector<8x96xf32> to vector<8x64xf32>
    %108 = arith.addf %106, %107 : vector<8x64xf32>
    %109 = arith.negf %108 : vector<8x64xf32>
    %110 = math.exp %109 : vector<8x64xf32>
    %cst_24 = arith.constant 1.000000e+00 : f32
    %111 = vector.broadcast %cst_24 : f32 to vector<8x64xf32>
    %112 = arith.addf %111, %110 : vector<8x64xf32>
    %113 = arith.divf %111, %112 : vector<8x64xf32>
    %114 = vector.extract_strided_slice %113 {offsets = [0, 0], sizes = [8, 32], strides = [1, 1]} : vector<8x64xf32> to vector<8x32xf32>
    %115 = vector.extract_strided_slice %113 {offsets = [0, 32], sizes = [8, 32], strides = [1, 1]} : vector<8x64xf32> to vector<8x32xf32>
    %116 = vector.extract_strided_slice %103 {offsets = [0, 64], sizes = [8, 32], strides = [1, 1]} : vector<8x96xf32> to vector<8x32xf32>
    %117 = vector.extract_strided_slice %105 {offsets = [0, 64], sizes = [8, 32], strides = [1, 1]} : vector<8x96xf32> to vector<8x32xf32>
    %118 = arith.addf %117, %9 : vector<8x32xf32>
    %119 = arith.mulf %114, %118 : vector<8x32xf32>
    %120 = arith.addf %116, %119 : vector<8x32xf32>
    %121 = math.tanh %120 : vector<8x32xf32>
    %122 = arith.subf %101, %121 : vector<8x32xf32>
    %123 = arith.mulf %115, %122 : vector<8x32xf32>
    %124 = arith.addf %121, %123 : vector<8x32xf32>
    %c32 = arith.constant 32 : index
    %c0_25 = arith.constant 0 : index
    %125 = vector.load %arg12[%c32, %c0_25] : memref<64x32xf32, #tpu.memory_space<vmem>>, vector<8x32xf32>
    tpu.vector_store %arg12[%c32, %c0_25], %124 {strides = array<i32>} : memref<64x32xf32, #tpu.memory_space<vmem>>, vector<8x32xf32>,
    %126 = vector.extract_strided_slice %7 {offsets = [40, 0], sizes = [8, 96], strides = [1, 1]} : vector<64x96xf32> to vector<8x96xf32>
    %127 = arith.truncf %124 : vector<8x32xf32> to vector<8x32xbf16>
    %cst_26 = arith.constant dense<0.000000e+00> : vector<8x96xf32>
    %128 = tpu.matmul %127, %2, %cst_26 {dimension_numbers = #tpu.dot_dimension_numbers<[1], [0], [0], [1], [0, 0, 1, 1], [], []>} : vector<8x32xbf16>, vector<32x96xbf16>, vector<8x96xf32> -> vector<8x96xf32>
    %129 = vector.extract_strided_slice %126 {offsets = [0, 0], sizes = [8, 64], strides = [1, 1]} : vector<8x96xf32> to vector<8x64xf32>
    %130 = vector.extract_strided_slice %128 {offsets = [0, 0], sizes = [8, 64], strides = [1, 1]} : vector<8x96xf32> to vector<8x64xf32>
    %131 = arith.addf %129, %130 : vector<8x64xf32>
    %132 = arith.negf %131 : vector<8x64xf32>
    %133 = math.exp %132 : vector<8x64xf32>
    %cst_27 = arith.constant 1.000000e+00 : f32
    %134 = vector.broadcast %cst_27 : f32 to vector<8x64xf32>
    %135 = arith.addf %134, %133 : vector<8x64xf32>
    %136 = arith.divf %134, %135 : vector<8x64xf32>
    %137 = vector.extract_strided_slice %136 {offsets = [0, 0], sizes = [8, 32], strides = [1, 1]} : vector<8x64xf32> to vector<8x32xf32>
    %138 = vector.extract_strided_slice %136 {offsets = [0, 32], sizes = [8, 32], strides = [1, 1]} : vector<8x64xf32> to vector<8x32xf32>
    %139 = vector.extract_strided_slice %126 {offsets = [0, 64], sizes = [8, 32], strides = [1, 1]} : vector<8x96xf32> to vector<8x32xf32>
    %140 = vector.extract_strided_slice %128 {offsets = [0, 64], sizes = [8, 32], strides = [1, 1]} : vector<8x96xf32> to vector<8x32xf32>
    %141 = arith.addf %140, %9 : vector<8x32xf32>
    %142 = arith.mulf %137, %141 : vector<8x32xf32>
    %143 = arith.addf %139, %142 : vector<8x32xf32>
    %144 = math.tanh %143 : vector<8x32xf32>
    %145 = arith.subf %124, %144 : vector<8x32xf32>
    %146 = arith.mulf %138, %145 : vector<8x32xf32>
    %147 = arith.addf %144, %146 : vector<8x32xf32>
    %c40 = arith.constant 40 : index
    %c0_28 = arith.constant 0 : index
    %148 = vector.load %arg12[%c40, %c0_28] : memref<64x32xf32, #tpu.memory_space<vmem>>, vector<8x32xf32>
    tpu.vector_store %arg12[%c40, %c0_28], %147 {strides = array<i32>} : memref<64x32xf32, #tpu.memory_space<vmem>>, vector<8x32xf32>,
    %149 = vector.extract_strided_slice %7 {offsets = [48, 0], sizes = [8, 96], strides = [1, 1]} : vector<64x96xf32> to vector<8x96xf32>
    %150 = arith.truncf %147 : vector<8x32xf32> to vector<8x32xbf16>
    %cst_29 = arith.constant dense<0.000000e+00> : vector<8x96xf32>
    %151 = tpu.matmul %150, %2, %cst_29 {dimension_numbers = #tpu.dot_dimension_numbers<[1], [0], [0], [1], [0, 0, 1, 1], [], []>} : vector<8x32xbf16>, vector<32x96xbf16>, vector<8x96xf32> -> vector<8x96xf32>
    %152 = vector.extract_strided_slice %149 {offsets = [0, 0], sizes = [8, 64], strides = [1, 1]} : vector<8x96xf32> to vector<8x64xf32>
    %153 = vector.extract_strided_slice %151 {offsets = [0, 0], sizes = [8, 64], strides = [1, 1]} : vector<8x96xf32> to vector<8x64xf32>
    %154 = arith.addf %152, %153 : vector<8x64xf32>
    %155 = arith.negf %154 : vector<8x64xf32>
    %156 = math.exp %155 : vector<8x64xf32>
    %cst_30 = arith.constant 1.000000e+00 : f32
    %157 = vector.broadcast %cst_30 : f32 to vector<8x64xf32>
    %158 = arith.addf %157, %156 : vector<8x64xf32>
    %159 = arith.divf %157, %158 : vector<8x64xf32>
    %160 = vector.extract_strided_slice %159 {offsets = [0, 0], sizes = [8, 32], strides = [1, 1]} : vector<8x64xf32> to vector<8x32xf32>
    %161 = vector.extract_strided_slice %159 {offsets = [0, 32], sizes = [8, 32], strides = [1, 1]} : vector<8x64xf32> to vector<8x32xf32>
    %162 = vector.extract_strided_slice %149 {offsets = [0, 64], sizes = [8, 32], strides = [1, 1]} : vector<8x96xf32> to vector<8x32xf32>
    %163 = vector.extract_strided_slice %151 {offsets = [0, 64], sizes = [8, 32], strides = [1, 1]} : vector<8x96xf32> to vector<8x32xf32>
    %164 = arith.addf %163, %9 : vector<8x32xf32>
    %165 = arith.mulf %160, %164 : vector<8x32xf32>
    %166 = arith.addf %162, %165 : vector<8x32xf32>
    %167 = math.tanh %166 : vector<8x32xf32>
    %168 = arith.subf %147, %167 : vector<8x32xf32>
    %169 = arith.mulf %161, %168 : vector<8x32xf32>
    %170 = arith.addf %167, %169 : vector<8x32xf32>
    %c48 = arith.constant 48 : index
    %c0_31 = arith.constant 0 : index
    %171 = vector.load %arg12[%c48, %c0_31] : memref<64x32xf32, #tpu.memory_space<vmem>>, vector<8x32xf32>
    tpu.vector_store %arg12[%c48, %c0_31], %170 {strides = array<i32>} : memref<64x32xf32, #tpu.memory_space<vmem>>, vector<8x32xf32>,
    %172 = vector.extract_strided_slice %7 {offsets = [56, 0], sizes = [8, 96], strides = [1, 1]} : vector<64x96xf32> to vector<8x96xf32>
    %173 = arith.truncf %170 : vector<8x32xf32> to vector<8x32xbf16>
    %cst_32 = arith.constant dense<0.000000e+00> : vector<8x96xf32>
    %174 = tpu.matmul %173, %2, %cst_32 {dimension_numbers = #tpu.dot_dimension_numbers<[1], [0], [0], [1], [0, 0, 1, 1], [], []>} : vector<8x32xbf16>, vector<32x96xbf16>, vector<8x96xf32> -> vector<8x96xf32>
    %175 = vector.extract_strided_slice %172 {offsets = [0, 0], sizes = [8, 64], strides = [1, 1]} : vector<8x96xf32> to vector<8x64xf32>
    %176 = vector.extract_strided_slice %174 {offsets = [0, 0], sizes = [8, 64], strides = [1, 1]} : vector<8x96xf32> to vector<8x64xf32>
    %177 = arith.addf %175, %176 : vector<8x64xf32>
    %178 = arith.negf %177 : vector<8x64xf32>
    %179 = math.exp %178 : vector<8x64xf32>
    %cst_33 = arith.constant 1.000000e+00 : f32
    %180 = vector.broadcast %cst_33 : f32 to vector<8x64xf32>
    %181 = arith.addf %180, %179 : vector<8x64xf32>
    %182 = arith.divf %180, %181 : vector<8x64xf32>
    %183 = vector.extract_strided_slice %182 {offsets = [0, 0], sizes = [8, 32], strides = [1, 1]} : vector<8x64xf32> to vector<8x32xf32>
    %184 = vector.extract_strided_slice %182 {offsets = [0, 32], sizes = [8, 32], strides = [1, 1]} : vector<8x64xf32> to vector<8x32xf32>
    %185 = vector.extract_strided_slice %172 {offsets = [0, 64], sizes = [8, 32], strides = [1, 1]} : vector<8x96xf32> to vector<8x32xf32>
    %186 = vector.extract_strided_slice %174 {offsets = [0, 64], sizes = [8, 32], strides = [1, 1]} : vector<8x96xf32> to vector<8x32xf32>
    %187 = arith.addf %186, %9 : vector<8x32xf32>
    %188 = arith.mulf %183, %187 : vector<8x32xf32>
    %189 = arith.addf %185, %188 : vector<8x32xf32>
    %190 = math.tanh %189 : vector<8x32xf32>
    %191 = arith.subf %170, %190 : vector<8x32xf32>
    %192 = arith.mulf %184, %191 : vector<8x32xf32>
    %193 = arith.addf %190, %192 : vector<8x32xf32>
    %c56 = arith.constant 56 : index
    %c0_34 = arith.constant 0 : index
    %194 = vector.load %arg12[%c56, %c0_34] : memref<64x32xf32, #tpu.memory_space<vmem>>, vector<8x32xf32>
    tpu.vector_store %arg12[%c56, %c0_34], %193 {strides = array<i32>} : memref<64x32xf32, #tpu.memory_space<vmem>>, vector<8x32xf32>,
    %c0_35 = arith.constant 0 : index
    %c0_36 = arith.constant 0 : index
    %195 = vector.load %arg12[%c0_35, %c0_36] : memref<64x32xf32, #tpu.memory_space<vmem>>, vector<64x32xf32>
    %196 = arith.truncf %195 : vector<64x32xf32> to vector<64x32xbf16>
    %c0_37 = arith.constant 0 : index
    %c0_38 = arith.constant 0 : index
    %197 = vector.load %arg5[%c0_37, %c0_38] : memref<32x96xbf16, #tpu.memory_space<vmem>>, vector<32x96xbf16>
    %c0_39 = arith.constant 0 : index
    %c0_40 = arith.constant 0 : index
    %198 = vector.load %arg6[%c0_39, %c0_40] : memref<32x96xbf16, #tpu.memory_space<vmem>>, vector<32x96xbf16>
    %c0_41 = arith.constant 0 : index
    %c0_42 = arith.constant 0 : index
    %199 = vector.load %arg7[%c0_41, %c0_42] : memref<1x96xf32, #tpu.memory_space<vmem>>, vector<1x96xf32>
    %c0_43 = arith.constant 0 : index
    %c0_44 = arith.constant 0 : index
    %200 = vector.load %arg8[%c0_43, %c0_44] : memref<1x32xf32, #tpu.memory_space<vmem>>, vector<1x32xf32>
    %cst_45 = arith.constant dense<0.000000e+00> : vector<64x96xf32>
    %201 = tpu.matmul %196, %197, %cst_45 {dimension_numbers = #tpu.dot_dimension_numbers<[1], [0], [0], [1], [0, 0, 1, 1], [], []>} : vector<64x32xbf16>, vector<32x96xbf16>, vector<64x96xf32> -> vector<64x96xf32>
    %202 = vector.broadcast %199 : vector<1x96xf32> to vector<64x96xf32>
    %203 = arith.addf %201, %202 : vector<64x96xf32>
    %204 = vector.shape_cast %200 : vector<1x32xf32> to vector<1x32xf32>
    %205 = vector.broadcast %204 : vector<1x32xf32> to vector<8x32xf32>
    %cst_46 = arith.constant 0.000000e+00 : f32
    %206 = vector.broadcast %cst_46 : f32 to vector<8x32xf32>
    %207 = vector.extract_strided_slice %203 {offsets = [0, 0], sizes = [8, 96], strides = [1, 1]} : vector<64x96xf32> to vector<8x96xf32>
    %208 = arith.truncf %206 : vector<8x32xf32> to vector<8x32xbf16>
    %cst_47 = arith.constant dense<0.000000e+00> : vector<8x96xf32>
    %209 = tpu.matmul %208, %198, %cst_47 {dimension_numbers = #tpu.dot_dimension_numbers<[1], [0], [0], [1], [0, 0, 1, 1], [], []>} : vector<8x32xbf16>, vector<32x96xbf16>, vector<8x96xf32> -> vector<8x96xf32>
    %210 = vector.extract_strided_slice %207 {offsets = [0, 0], sizes = [8, 64], strides = [1, 1]} : vector<8x96xf32> to vector<8x64xf32>
    %211 = vector.extract_strided_slice %209 {offsets = [0, 0], sizes = [8, 64], strides = [1, 1]} : vector<8x96xf32> to vector<8x64xf32>
    %212 = arith.addf %210, %211 : vector<8x64xf32>
    %213 = arith.negf %212 : vector<8x64xf32>
    %214 = math.exp %213 : vector<8x64xf32>
    %cst_48 = arith.constant 1.000000e+00 : f32
    %215 = vector.broadcast %cst_48 : f32 to vector<8x64xf32>
    %216 = arith.addf %215, %214 : vector<8x64xf32>
    %217 = arith.divf %215, %216 : vector<8x64xf32>
    %218 = vector.extract_strided_slice %217 {offsets = [0, 0], sizes = [8, 32], strides = [1, 1]} : vector<8x64xf32> to vector<8x32xf32>
    %219 = vector.extract_strided_slice %217 {offsets = [0, 32], sizes = [8, 32], strides = [1, 1]} : vector<8x64xf32> to vector<8x32xf32>
    %220 = vector.extract_strided_slice %207 {offsets = [0, 64], sizes = [8, 32], strides = [1, 1]} : vector<8x96xf32> to vector<8x32xf32>
    %221 = vector.extract_strided_slice %209 {offsets = [0, 64], sizes = [8, 32], strides = [1, 1]} : vector<8x96xf32> to vector<8x32xf32>
    %222 = arith.addf %221, %205 : vector<8x32xf32>
    %223 = arith.mulf %218, %222 : vector<8x32xf32>
    %224 = arith.addf %220, %223 : vector<8x32xf32>
    %225 = math.tanh %224 : vector<8x32xf32>
    %226 = arith.subf %206, %225 : vector<8x32xf32>
    %227 = arith.mulf %219, %226 : vector<8x32xf32>
    %228 = arith.addf %225, %227 : vector<8x32xf32>
    %229 = vector.extract_strided_slice %203 {offsets = [8, 0], sizes = [8, 96], strides = [1, 1]} : vector<64x96xf32> to vector<8x96xf32>
    %230 = arith.truncf %228 : vector<8x32xf32> to vector<8x32xbf16>
    %cst_49 = arith.constant dense<0.000000e+00> : vector<8x96xf32>
    %231 = tpu.matmul %230, %198, %cst_49 {dimension_numbers = #tpu.dot_dimension_numbers<[1], [0], [0], [1], [0, 0, 1, 1], [], []>} : vector<8x32xbf16>, vector<32x96xbf16>, vector<8x96xf32> -> vector<8x96xf32>
    %232 = vector.extract_strided_slice %229 {offsets = [0, 0], sizes = [8, 64], strides = [1, 1]} : vector<8x96xf32> to vector<8x64xf32>
    %233 = vector.extract_strided_slice %231 {offsets = [0, 0], sizes = [8, 64], strides = [1, 1]} : vector<8x96xf32> to vector<8x64xf32>
    %234 = arith.addf %232, %233 : vector<8x64xf32>
    %235 = arith.negf %234 : vector<8x64xf32>
    %236 = math.exp %235 : vector<8x64xf32>
    %cst_50 = arith.constant 1.000000e+00 : f32
    %237 = vector.broadcast %cst_50 : f32 to vector<8x64xf32>
    %238 = arith.addf %237, %236 : vector<8x64xf32>
    %239 = arith.divf %237, %238 : vector<8x64xf32>
    %240 = vector.extract_strided_slice %239 {offsets = [0, 0], sizes = [8, 32], strides = [1, 1]} : vector<8x64xf32> to vector<8x32xf32>
    %241 = vector.extract_strided_slice %239 {offsets = [0, 32], sizes = [8, 32], strides = [1, 1]} : vector<8x64xf32> to vector<8x32xf32>
    %242 = vector.extract_strided_slice %229 {offsets = [0, 64], sizes = [8, 32], strides = [1, 1]} : vector<8x96xf32> to vector<8x32xf32>
    %243 = vector.extract_strided_slice %231 {offsets = [0, 64], sizes = [8, 32], strides = [1, 1]} : vector<8x96xf32> to vector<8x32xf32>
    %244 = arith.addf %243, %205 : vector<8x32xf32>
    %245 = arith.mulf %240, %244 : vector<8x32xf32>
    %246 = arith.addf %242, %245 : vector<8x32xf32>
    %247 = math.tanh %246 : vector<8x32xf32>
    %248 = arith.subf %228, %247 : vector<8x32xf32>
    %249 = arith.mulf %241, %248 : vector<8x32xf32>
    %250 = arith.addf %247, %249 : vector<8x32xf32>
    %251 = vector.extract_strided_slice %203 {offsets = [16, 0], sizes = [8, 96], strides = [1, 1]} : vector<64x96xf32> to vector<8x96xf32>
    %252 = arith.truncf %250 : vector<8x32xf32> to vector<8x32xbf16>
    %cst_51 = arith.constant dense<0.000000e+00> : vector<8x96xf32>
    %253 = tpu.matmul %252, %198, %cst_51 {dimension_numbers = #tpu.dot_dimension_numbers<[1], [0], [0], [1], [0, 0, 1, 1], [], []>} : vector<8x32xbf16>, vector<32x96xbf16>, vector<8x96xf32> -> vector<8x96xf32>
    %254 = vector.extract_strided_slice %251 {offsets = [0, 0], sizes = [8, 64], strides = [1, 1]} : vector<8x96xf32> to vector<8x64xf32>
    %255 = vector.extract_strided_slice %253 {offsets = [0, 0], sizes = [8, 64], strides = [1, 1]} : vector<8x96xf32> to vector<8x64xf32>
    %256 = arith.addf %254, %255 : vector<8x64xf32>
    %257 = arith.negf %256 : vector<8x64xf32>
    %258 = math.exp %257 : vector<8x64xf32>
    %cst_52 = arith.constant 1.000000e+00 : f32
    %259 = vector.broadcast %cst_52 : f32 to vector<8x64xf32>
    %260 = arith.addf %259, %258 : vector<8x64xf32>
    %261 = arith.divf %259, %260 : vector<8x64xf32>
    %262 = vector.extract_strided_slice %261 {offsets = [0, 0], sizes = [8, 32], strides = [1, 1]} : vector<8x64xf32> to vector<8x32xf32>
    %263 = vector.extract_strided_slice %261 {offsets = [0, 32], sizes = [8, 32], strides = [1, 1]} : vector<8x64xf32> to vector<8x32xf32>
    %264 = vector.extract_strided_slice %251 {offsets = [0, 64], sizes = [8, 32], strides = [1, 1]} : vector<8x96xf32> to vector<8x32xf32>
    %265 = vector.extract_strided_slice %253 {offsets = [0, 64], sizes = [8, 32], strides = [1, 1]} : vector<8x96xf32> to vector<8x32xf32>
    %266 = arith.addf %265, %205 : vector<8x32xf32>
    %267 = arith.mulf %262, %266 : vector<8x32xf32>
    %268 = arith.addf %264, %267 : vector<8x32xf32>
    %269 = math.tanh %268 : vector<8x32xf32>
    %270 = arith.subf %250, %269 : vector<8x32xf32>
    %271 = arith.mulf %263, %270 : vector<8x32xf32>
    %272 = arith.addf %269, %271 : vector<8x32xf32>
    %273 = vector.extract_strided_slice %203 {offsets = [24, 0], sizes = [8, 96], strides = [1, 1]} : vector<64x96xf32> to vector<8x96xf32>
    %274 = arith.truncf %272 : vector<8x32xf32> to vector<8x32xbf16>
    %cst_53 = arith.constant dense<0.000000e+00> : vector<8x96xf32>
    %275 = tpu.matmul %274, %198, %cst_53 {dimension_numbers = #tpu.dot_dimension_numbers<[1], [0], [0], [1], [0, 0, 1, 1], [], []>} : vector<8x32xbf16>, vector<32x96xbf16>, vector<8x96xf32> -> vector<8x96xf32>
    %276 = vector.extract_strided_slice %273 {offsets = [0, 0], sizes = [8, 64], strides = [1, 1]} : vector<8x96xf32> to vector<8x64xf32>
    %277 = vector.extract_strided_slice %275 {offsets = [0, 0], sizes = [8, 64], strides = [1, 1]} : vector<8x96xf32> to vector<8x64xf32>
    %278 = arith.addf %276, %277 : vector<8x64xf32>
    %279 = arith.negf %278 : vector<8x64xf32>
    %280 = math.exp %279 : vector<8x64xf32>
    %cst_54 = arith.constant 1.000000e+00 : f32
    %281 = vector.broadcast %cst_54 : f32 to vector<8x64xf32>
    %282 = arith.addf %281, %280 : vector<8x64xf32>
    %283 = arith.divf %281, %282 : vector<8x64xf32>
    %284 = vector.extract_strided_slice %283 {offsets = [0, 0], sizes = [8, 32], strides = [1, 1]} : vector<8x64xf32> to vector<8x32xf32>
    %285 = vector.extract_strided_slice %283 {offsets = [0, 32], sizes = [8, 32], strides = [1, 1]} : vector<8x64xf32> to vector<8x32xf32>
    %286 = vector.extract_strided_slice %273 {offsets = [0, 64], sizes = [8, 32], strides = [1, 1]} : vector<8x96xf32> to vector<8x32xf32>
    %287 = vector.extract_strided_slice %275 {offsets = [0, 64], sizes = [8, 32], strides = [1, 1]} : vector<8x96xf32> to vector<8x32xf32>
    %288 = arith.addf %287, %205 : vector<8x32xf32>
    %289 = arith.mulf %284, %288 : vector<8x32xf32>
    %290 = arith.addf %286, %289 : vector<8x32xf32>
    %291 = math.tanh %290 : vector<8x32xf32>
    %292 = arith.subf %272, %291 : vector<8x32xf32>
    %293 = arith.mulf %285, %292 : vector<8x32xf32>
    %294 = arith.addf %291, %293 : vector<8x32xf32>
    %295 = vector.extract_strided_slice %203 {offsets = [32, 0], sizes = [8, 96], strides = [1, 1]} : vector<64x96xf32> to vector<8x96xf32>
    %296 = arith.truncf %294 : vector<8x32xf32> to vector<8x32xbf16>
    %cst_55 = arith.constant dense<0.000000e+00> : vector<8x96xf32>
    %297 = tpu.matmul %296, %198, %cst_55 {dimension_numbers = #tpu.dot_dimension_numbers<[1], [0], [0], [1], [0, 0, 1, 1], [], []>} : vector<8x32xbf16>, vector<32x96xbf16>, vector<8x96xf32> -> vector<8x96xf32>
    %298 = vector.extract_strided_slice %295 {offsets = [0, 0], sizes = [8, 64], strides = [1, 1]} : vector<8x96xf32> to vector<8x64xf32>
    %299 = vector.extract_strided_slice %297 {offsets = [0, 0], sizes = [8, 64], strides = [1, 1]} : vector<8x96xf32> to vector<8x64xf32>
    %300 = arith.addf %298, %299 : vector<8x64xf32>
    %301 = arith.negf %300 : vector<8x64xf32>
    %302 = math.exp %301 : vector<8x64xf32>
    %cst_56 = arith.constant 1.000000e+00 : f32
    %303 = vector.broadcast %cst_56 : f32 to vector<8x64xf32>
    %304 = arith.addf %303, %302 : vector<8x64xf32>
    %305 = arith.divf %303, %304 : vector<8x64xf32>
    %306 = vector.extract_strided_slice %305 {offsets = [0, 0], sizes = [8, 32], strides = [1, 1]} : vector<8x64xf32> to vector<8x32xf32>
    %307 = vector.extract_strided_slice %305 {offsets = [0, 32], sizes = [8, 32], strides = [1, 1]} : vector<8x64xf32> to vector<8x32xf32>
    %308 = vector.extract_strided_slice %295 {offsets = [0, 64], sizes = [8, 32], strides = [1, 1]} : vector<8x96xf32> to vector<8x32xf32>
    %309 = vector.extract_strided_slice %297 {offsets = [0, 64], sizes = [8, 32], strides = [1, 1]} : vector<8x96xf32> to vector<8x32xf32>
    %310 = arith.addf %309, %205 : vector<8x32xf32>
    %311 = arith.mulf %306, %310 : vector<8x32xf32>
    %312 = arith.addf %308, %311 : vector<8x32xf32>
    %313 = math.tanh %312 : vector<8x32xf32>
    %314 = arith.subf %294, %313 : vector<8x32xf32>
    %315 = arith.mulf %307, %314 : vector<8x32xf32>
    %316 = arith.addf %313, %315 : vector<8x32xf32>
    %317 = vector.extract_strided_slice %203 {offsets = [40, 0], sizes = [8, 96], strides = [1, 1]} : vector<64x96xf32> to vector<8x96xf32>
    %318 = arith.truncf %316 : vector<8x32xf32> to vector<8x32xbf16>
    %cst_57 = arith.constant dense<0.000000e+00> : vector<8x96xf32>
    %319 = tpu.matmul %318, %198, %cst_57 {dimension_numbers = #tpu.dot_dimension_numbers<[1], [0], [0], [1], [0, 0, 1, 1], [], []>} : vector<8x32xbf16>, vector<32x96xbf16>, vector<8x96xf32> -> vector<8x96xf32>
    %320 = vector.extract_strided_slice %317 {offsets = [0, 0], sizes = [8, 64], strides = [1, 1]} : vector<8x96xf32> to vector<8x64xf32>
    %321 = vector.extract_strided_slice %319 {offsets = [0, 0], sizes = [8, 64], strides = [1, 1]} : vector<8x96xf32> to vector<8x64xf32>
    %322 = arith.addf %320, %321 : vector<8x64xf32>
    %323 = arith.negf %322 : vector<8x64xf32>
    %324 = math.exp %323 : vector<8x64xf32>
    %cst_58 = arith.constant 1.000000e+00 : f32
    %325 = vector.broadcast %cst_58 : f32 to vector<8x64xf32>
    %326 = arith.addf %325, %324 : vector<8x64xf32>
    %327 = arith.divf %325, %326 : vector<8x64xf32>
    %328 = vector.extract_strided_slice %327 {offsets = [0, 0], sizes = [8, 32], strides = [1, 1]} : vector<8x64xf32> to vector<8x32xf32>
    %329 = vector.extract_strided_slice %327 {offsets = [0, 32], sizes = [8, 32], strides = [1, 1]} : vector<8x64xf32> to vector<8x32xf32>
    %330 = vector.extract_strided_slice %317 {offsets = [0, 64], sizes = [8, 32], strides = [1, 1]} : vector<8x96xf32> to vector<8x32xf32>
    %331 = vector.extract_strided_slice %319 {offsets = [0, 64], sizes = [8, 32], strides = [1, 1]} : vector<8x96xf32> to vector<8x32xf32>
    %332 = arith.addf %331, %205 : vector<8x32xf32>
    %333 = arith.mulf %328, %332 : vector<8x32xf32>
    %334 = arith.addf %330, %333 : vector<8x32xf32>
    %335 = math.tanh %334 : vector<8x32xf32>
    %336 = arith.subf %316, %335 : vector<8x32xf32>
    %337 = arith.mulf %329, %336 : vector<8x32xf32>
    %338 = arith.addf %335, %337 : vector<8x32xf32>
    %339 = vector.extract_strided_slice %203 {offsets = [48, 0], sizes = [8, 96], strides = [1, 1]} : vector<64x96xf32> to vector<8x96xf32>
    %340 = arith.truncf %338 : vector<8x32xf32> to vector<8x32xbf16>
    %cst_59 = arith.constant dense<0.000000e+00> : vector<8x96xf32>
    %341 = tpu.matmul %340, %198, %cst_59 {dimension_numbers = #tpu.dot_dimension_numbers<[1], [0], [0], [1], [0, 0, 1, 1], [], []>} : vector<8x32xbf16>, vector<32x96xbf16>, vector<8x96xf32> -> vector<8x96xf32>
    %342 = vector.extract_strided_slice %339 {offsets = [0, 0], sizes = [8, 64], strides = [1, 1]} : vector<8x96xf32> to vector<8x64xf32>
    %343 = vector.extract_strided_slice %341 {offsets = [0, 0], sizes = [8, 64], strides = [1, 1]} : vector<8x96xf32> to vector<8x64xf32>
    %344 = arith.addf %342, %343 : vector<8x64xf32>
    %345 = arith.negf %344 : vector<8x64xf32>
    %346 = math.exp %345 : vector<8x64xf32>
    %cst_60 = arith.constant 1.000000e+00 : f32
    %347 = vector.broadcast %cst_60 : f32 to vector<8x64xf32>
    %348 = arith.addf %347, %346 : vector<8x64xf32>
    %349 = arith.divf %347, %348 : vector<8x64xf32>
    %350 = vector.extract_strided_slice %349 {offsets = [0, 0], sizes = [8, 32], strides = [1, 1]} : vector<8x64xf32> to vector<8x32xf32>
    %351 = vector.extract_strided_slice %349 {offsets = [0, 32], sizes = [8, 32], strides = [1, 1]} : vector<8x64xf32> to vector<8x32xf32>
    %352 = vector.extract_strided_slice %339 {offsets = [0, 64], sizes = [8, 32], strides = [1, 1]} : vector<8x96xf32> to vector<8x32xf32>
    %353 = vector.extract_strided_slice %341 {offsets = [0, 64], sizes = [8, 32], strides = [1, 1]} : vector<8x96xf32> to vector<8x32xf32>
    %354 = arith.addf %353, %205 : vector<8x32xf32>
    %355 = arith.mulf %350, %354 : vector<8x32xf32>
    %356 = arith.addf %352, %355 : vector<8x32xf32>
    %357 = math.tanh %356 : vector<8x32xf32>
    %358 = arith.subf %338, %357 : vector<8x32xf32>
    %359 = arith.mulf %351, %358 : vector<8x32xf32>
    %360 = arith.addf %357, %359 : vector<8x32xf32>
    %361 = vector.extract_strided_slice %203 {offsets = [56, 0], sizes = [8, 96], strides = [1, 1]} : vector<64x96xf32> to vector<8x96xf32>
    %362 = arith.truncf %360 : vector<8x32xf32> to vector<8x32xbf16>
    %cst_61 = arith.constant dense<0.000000e+00> : vector<8x96xf32>
    %363 = tpu.matmul %362, %198, %cst_61 {dimension_numbers = #tpu.dot_dimension_numbers<[1], [0], [0], [1], [0, 0, 1, 1], [], []>} : vector<8x32xbf16>, vector<32x96xbf16>, vector<8x96xf32> -> vector<8x96xf32>
    %364 = vector.extract_strided_slice %361 {offsets = [0, 0], sizes = [8, 64], strides = [1, 1]} : vector<8x96xf32> to vector<8x64xf32>
    %365 = vector.extract_strided_slice %363 {offsets = [0, 0], sizes = [8, 64], strides = [1, 1]} : vector<8x96xf32> to vector<8x64xf32>
    %366 = arith.addf %364, %365 : vector<8x64xf32>
    %367 = arith.negf %366 : vector<8x64xf32>
    %368 = math.exp %367 : vector<8x64xf32>
    %cst_62 = arith.constant 1.000000e+00 : f32
    %369 = vector.broadcast %cst_62 : f32 to vector<8x64xf32>
    %370 = arith.addf %369, %368 : vector<8x64xf32>
    %371 = arith.divf %369, %370 : vector<8x64xf32>
    %372 = vector.extract_strided_slice %371 {offsets = [0, 0], sizes = [8, 32], strides = [1, 1]} : vector<8x64xf32> to vector<8x32xf32>
    %373 = vector.extract_strided_slice %371 {offsets = [0, 32], sizes = [8, 32], strides = [1, 1]} : vector<8x64xf32> to vector<8x32xf32>
    %374 = vector.extract_strided_slice %361 {offsets = [0, 64], sizes = [8, 32], strides = [1, 1]} : vector<8x96xf32> to vector<8x32xf32>
    %375 = vector.extract_strided_slice %363 {offsets = [0, 64], sizes = [8, 32], strides = [1, 1]} : vector<8x96xf32> to vector<8x32xf32>
    %376 = arith.addf %375, %205 : vector<8x32xf32>
    %377 = arith.mulf %372, %376 : vector<8x32xf32>
    %378 = arith.addf %374, %377 : vector<8x32xf32>
    %379 = math.tanh %378 : vector<8x32xf32>
    %380 = arith.subf %360, %379 : vector<8x32xf32>
    %381 = arith.mulf %373, %380 : vector<8x32xf32>
    %382 = arith.addf %379, %381 : vector<8x32xf32>
    %383 = arith.truncf %382 : vector<8x32xf32> to vector<8x32xbf16>
    %c0_63 = arith.constant 0 : index
    %c0_64 = arith.constant 0 : index
    %384 = vector.load %arg9[%c0_63, %c0_64] : memref<32x8xbf16, #tpu.memory_space<vmem>>, vector<32x8xbf16>
    %cst_65 = arith.constant dense<0.000000e+00> : vector<8x8xf32>
    %385 = tpu.matmul %383, %384, %cst_65 {dimension_numbers = #tpu.dot_dimension_numbers<[1], [0], [0], [1], [0, 0, 1, 1], [], []>} : vector<8x32xbf16>, vector<32x8xbf16>, vector<8x8xf32> -> vector<8x8xf32>
    %c0_66 = arith.constant 0 : index
    %c0_67 = arith.constant 0 : index
    %386 = vector.load %arg10[%c0_66, %c0_67] : memref<1x8xf32, #tpu.memory_space<vmem>>, vector<1x8xf32>
    %387 = vector.broadcast %386 : vector<1x8xf32> to vector<8x8xf32>
    %388 = arith.addf %385, %387 : vector<8x8xf32>
    %c0_68 = arith.constant 0 : index
    %c0_69 = arith.constant 0 : index
    %389 = vector.load %arg11[%c0_68, %c0_69] : memref<8x8xf32, #tpu.memory_space<vmem>>, vector<8x8xf32>
    tpu.vector_store %arg11[%c0_68, %c0_69], %388 {strides = array<i32>} : memref<8x8xf32, #tpu.memory_space<vmem>>, vector<8x8xf32>,
    return
  }
}

</mosaic_0001>

<llo_original>
// kernel: gru_model_forward.1
$region0: #{gru_model_forward.1}
  #allocation0 [shape = 'u32[]', space=smem, size = 0x4, offset = 0x4, fixed_abs, tag = 'smem constant byte address 0x4 - core index']
  #allocation1 [shape = 'u32[144,128]{1,0:T(1,128)}', space=vmem, size = 0x12000, scoped, tag = 'internal scratch']
  #allocation2 [shape = 'f32[64,32]{1,0:T(8,128)}', space=vmem, size = 0x8000, scoped, tag = 'scratch operand']
  %s0 = inlined_call_operand.vmem [shape: bf16[64,8], index: 0, kind: input, shape index: {}]
  %s1 = inlined_call_operand.vmem [shape: bf16[8,96], index: 1, kind: input, shape index: {}]
  %s2 = inlined_call_operand.vmem [shape: bf16[32,96], index: 2, kind: input, shape index: {}]
  %s3 = inlined_call_operand.vmem [shape: f32[1,96], index: 3, kind: input, shape index: {}]
  %s4 = inlined_call_operand.vmem [shape: f32[1,32], index: 4, kind: input, shape index: {}]
  %s5 = inlined_call_operand.vmem [shape: bf16[32,96], index: 5, kind: input, shape index: {}]
  %s6 = inlined_call_operand.vmem [shape: bf16[32,96], index: 6, kind: input, shape index: {}]
  %s7 = inlined_call_operand.vmem [shape: f32[1,96], index: 7, kind: input, shape index: {}]
  %s8 = inlined_call_operand.vmem [shape: f32[1,32], index: 8, kind: input, shape index: {}]
  %s9 = inlined_call_operand.vmem [shape: bf16[32,8], index: 9, kind: input, shape index: {}]
  %s10 = inlined_call_operand.vmem [shape: f32[1,8], index: 10, kind: input, shape index: {}]
  %s11 = inlined_call_operand.vmem [shape: f32[8,8], index: 11, kind: output, shape index: {}]
  %s12 = sld [smem:[#allocation0]]
  $region54: #{gru_model_forward.1} parent=0
    _
  %s14 = ssub.s32 1, %s12
  %s15 = scalar_select 0, %s14, %s12
  // Predicated region
  $region2: #{gru_model_forward.1} parent=0 // pred_check
    _
  $region3: #{gru_model_forward.1} parent=0 // pred_check_branch
    %17 = sbr.rel (0) target = $region5
  $region4: #{gru_model_forward.1} parent=0 // pred_region
    _
  $region5: #{gru_model_forward.1} parent=0 // pred_fallthru
    _
  // Predicated region
  $region6: #{gru_model_forward.1} parent=0 // pred_check
    _
  $region7: #{gru_model_forward.1} parent=0 // pred_check_branch
    %19 = sbr.rel (0) target = $region9
  $region8: #{gru_model_forward.1} parent=0 // pred_region
    _
  $region9: #{gru_model_forward.1} parent=0 // pred_fallthru
    _
  // Predicated region
  $region10: #{gru_model_forward.1} parent=0 // pred_check
    _
  $region11: #{gru_model_forward.1} parent=0 // pred_check_branch
    %21 = sbr.rel (0) target = $region13
  $region12: #{gru_model_forward.1} parent=0 // pred_region
    _
  $region13: #{gru_model_forward.1} parent=0 // pred_fallthru
    _
  // Predicated region
  $region14: #{gru_model_forward.1} parent=0 // pred_check
    _
  $region15: #{gru_model_forward.1} parent=0 // pred_check_branch
    %23 = sbr.rel (0) target = $region17
  $region16: #{gru_model_forward.1} parent=0 // pred_region
    _
  $region17: #{gru_model_forward.1} parent=0 // pred_fallthru
    _
  // Predicated region
  $region18: #{gru_model_forward.1} parent=0 // pred_check
    _
  $region19: #{gru_model_forward.1} parent=0 // pred_check_branch
    %25 = sbr.rel (0) target = $region21
  $region20: #{gru_model_forward.1} parent=0 // pred_region
    _
  $region21: #{gru_model_forward.1} parent=0 // pred_fallthru
    _
  // Predicated region
  $region22: #{gru_model_forward.1} parent=0 // pred_check
    _
  $region23: #{gru_model_forward.1} parent=0 // pred_check_branch
    %27 = sbr.rel (0) target = $region25
  $region24: #{gru_model_forward.1} parent=0 // pred_region
    _
  $region25: #{gru_model_forward.1} parent=0 // pred_fallthru
    _
  // Predicated region
  $region26: #{gru_model_forward.1} parent=0 // pred_check
    _
  $region27: #{gru_model_forward.1} parent=0 // pred_check_branch
    %29 = sbr.rel (0) target = $region29
  $region28: #{gru_model_forward.1} parent=0 // pred_region
    _
  $region29: #{gru_model_forward.1} parent=0 // pred_fallthru
    _
  // Predicated region
  $region30: #{gru_model_forward.1} parent=0 // pred_check
    _
  $region31: #{gru_model_forward.1} parent=0 // pred_check_branch
    %31 = sbr.rel (0) target = $region33
  $region32: #{gru_model_forward.1} parent=0 // pred_region
    _
  $region33: #{gru_model_forward.1} parent=0 // pred_fallthru
    _
  // Predicated region
  $region34: #{gru_model_forward.1} parent=0 // pred_check
    _
  $region35: #{gru_model_forward.1} parent=0 // pred_check_branch
    %33 = sbr.rel (0) target = $region37
  $region36: #{gru_model_forward.1} parent=0 // pred_region
    _
  $region37: #{gru_model_forward.1} parent=0 // pred_fallthru
    _
  // Predicated region
  $region38: #{gru_model_forward.1} parent=0 // pred_check
    _
  $region39: #{gru_model_forward.1} parent=0 // pred_check_branch
    %35 = sbr.rel (0) target = $region41
  $region40: #{gru_model_forward.1} parent=0 // pred_region
    _
  $region41: #{gru_model_forward.1} parent=0 // pred_fallthru
    _
  // Predicated region
  $region42: #{gru_model_forward.1} parent=0 // pred_check
    _
  $region43: #{gru_model_forward.1} parent=0 // pred_check_branch
    %37 = sbr.rel (0) target = $region45
  $region44: #{gru_model_forward.1} parent=0 // pred_region
    _
  $region45: #{gru_model_forward.1} parent=0 // pred_fallthru
    _
  %v39 = vld [vmem:[%s0] sm:$0xf]
  %v40 = vld [vmem:[%s0 + $0x4] sm:$0xf]
  %v41 = vld [vmem:[%s0 + $0x8] sm:$0xf]
  %v42 = vld [vmem:[%s0 + $0xc] sm:$0xf]
  %v43 = vld [vmem:[%s0 + $0x10] sm:$0xf]
  %v44 = vld [vmem:[%s0 + $0x14] sm:$0xf]
  %v45 = vld [vmem:[%s0 + $0x18] sm:$0xf]
  %v46 = vld [vmem:[%s0 + $0x1c] sm:$0xf]
  %v47 = vld [vmem:[%s1] sm:$0xf]
  %v48 = vld [vmem:[%s2] sm:$0xf]
  %v49 = vld [vmem:[%s2 + $0x4] sm:$0xf]
  %v50 = vld [vmem:[%s2 + $0x8] sm:$0xf]
  %v51 = vld [vmem:[%s2 + $0xc] sm:$0xf]
  %v52 = vld [vmem:[%s3] sm:$0x1]
  %v53 = vld [vmem:[%s4] sm:$0x1]
  %v55 = vlaneseq
  %v56 = vshrl.u32 %v55, 7
  %v57 = vsub.s32 0, %v56
  %v58 = vrot.slane %v52, %v57
  %v68 = vunpack.c.l.b16 %v39
  %v69 = vunpack.c.l.b16 %v40
  %v70 = vunpack.c.l.b16 %v41
  %v71 = vunpack.c.l.b16 %v42
  %v72 = vunpack.c.l.b16 %v43
  %v73 = vunpack.c.l.b16 %v44
  %v74 = vunpack.c.l.b16 %v45
  %v75 = vunpack.c.l.b16 %v46
  %v76 = vpack.c.b16 %v69, %v68
  %v77 = vpack.c.b16 %v71, %v70
  %v78 = vpack.c.b16 %v73, %v72
  %v79 = vpack.c.b16 %v75, %v74
  %vm80 = vcmask 64512
  %v82 = vsel %vm80, %v76, 0
  %v85 = vsel %vm80, %v77, 0
  %v88 = vsel %vm80, %v78, 0
  %v91 = vsel %vm80, %v79, 0
  %vm93 = vcmask 1043456
  %v95 = vsel %vm93, %v47, 0
  %97 = vmatprep.subr.bf16.mxu0 0
  %98 = vmatpush1.bf16.msra.mxu0 0
  %99 = vmatprep.subr.bf16.mxu0 0
  %100 = vmatpush1.bf16.msra.mxu0 0
  %101 = vmatprep.subr.bf16.mxu0 0
  %102 = vmatpush1.bf16.msra.mxu0 0
  %103 = vmatprep.subr.bf16.mxu0 0
  %104 = vmatpush1.bf16.msra.mxu0 0
  %105 = vmatprep.subr.bf16.mxu0 0
  %106 = vmatpush1.bf16.msra.mxu0 0
  %107 = vmatprep.subr.bf16.mxu0 0
  %108 = vmatpush1.bf16.msra.mxu0 0
  %109 = vmatprep.subr.bf16.mxu0 0
  %110 = vmatpush1.bf16.msra.mxu0 0
  %111 = vmatprep.subr.bf16.mxu0 0
  %112 = vmatpush1.bf16.msra.mxu0 %v95
  %113 = vmatprep.subr.bf16.mxu0 0
  %114 = vmatpush2.bf16.msra.mxu0 0
  %115 = vmatprep.subr.bf16.mxu0 0
  %116 = vmatpush2.bf16.msra.mxu0 0
  %117 = vmatprep.subr.bf16.mxu0 0
  %118 = vmatpush2.bf16.msra.mxu0 0
  %119 = vmatprep.subr.bf16.mxu0 0
  %120 = vmatpush2.bf16.msra.mxu0 0
  %121 = vmatprep.subr.bf16.mxu0 0
  %122 = vmatpush2.bf16.msra.mxu0 0
  %123 = vmatprep.subr.bf16.mxu0 0
  %124 = vmatpush2.bf16.msra.mxu0 0
  %125 = vmatprep.subr.bf16.mxu0 0
  %126 = vmatpush2.bf16.msra.mxu0 0
  %127 = vmatprep.subr.bf16.mxu0 0
  %128 = vmatpush2.bf16.msra.mxu0 0
  %129 = vmatprep.mubr.bf16.mxu0 0
  %130 = vmatmul.mubr.bf16.gmra.mxu0 %v82
  %v131 = vpop.f32.mrf.mxu0
  %v132 = vadd.f32 %v58, %v131
  %v133 = vpop.f32.mrf.mxu0
  %v134 = vpop.f32.mrf.mxu0
  %v135 = vadd.f32 %v58, %v134
  %v136 = vpop.f32.mrf.mxu0
  %137 = vmatprep.mubr.bf16.mxu0 0
  %138 = vmatmul.mubr.bf16.gmra.mxu0 %v85
  %v139 = vpop.f32.mrf.mxu0
  %v140 = vadd.f32 %v58, %v139
  %v141 = vpop.f32.mrf.mxu0
  %v142 = vpop.f32.mrf.mxu0
  %v143 = vadd.f32 %v58, %v142
  %v144 = vpop.f32.mrf.mxu0
  %145 = vmatprep.mubr.bf16.mxu0 0
  %146 = vmatmul.mubr.bf16.gmra.mxu0 %v88
  %v147 = vpop.f32.mrf.mxu0
  %v148 = vadd.f32 %v58, %v147
  %v149 = vpop.f32.mrf.mxu0
  %v150 = vpop.f32.mrf.mxu0
  %v151 = vadd.f32 %v58, %v150
  %v152 = vpop.f32.mrf.mxu0
  %153 = vmatprep.mubr.bf16.mxu0 0
  %154 = vmatmul.mubr.bf16.gmra.mxu0 %v91
  %v155 = vpop.f32.mrf.mxu0
  %v156 = vadd.f32 %v58, %v155
  %v157 = vpop.f32.mrf.mxu0
  %v158 = vpop.f32.mrf.mxu0
  %v159 = vadd.f32 %v58, %v158
  %v160 = vpop.f32.mrf.mxu0
  %161 = vdwg.mxu0
  %v163 = vlaneseq
  %v164 = vshrl.u32 %v163, 7
  %v165 = vsub.s32 0, %v164
  %v166 = vrot.slane %v53, %v165
  %v171 = vunpack.c.l.b16 %v48
  %v172 = vunpack.c.l.b16 %v49
  %v173 = vunpack.c.l.b16 %v50
  %v174 = vunpack.c.l.b16 %v51
  %v175 = vpack.c.b16 %v172, %v171
  %v176 = vpack.c.b16 %v174, %v173
  %vm179 = vcmask 261120
  %v181 = vsel %vm179, 0, 0
  %183 = vmatprep.subr.bf16.mxu0 0
  %184 = vmatpush1.bf16.msra.mxu0 0
  %185 = vmatprep.subr.bf16.mxu0 0
  %186 = vmatpush1.bf16.msra.mxu0 0
  %187 = vmatprep.subr.bf16.mxu0 0
  %188 = vmatpush1.bf16.msra.mxu0 0
  %189 = vmatprep.subr.bf16.mxu0 0
  %190 = vmatpush1.bf16.msra.mxu0 0
  %191 = vmatprep.subr.bf16.mxu0 0
  %192 = vmatpush1.bf16.msra.mxu0 0
  %193 = vmatprep.subr.bf16.mxu0 0
  %194 = vmatpush1.bf16.msra.mxu0 0
  %195 = vmatprep.subr.bf16.mxu0 0
  %196 = vmatpush1.bf16.msra.mxu0 %v176
  %197 = vmatprep.subr.bf16.mxu0 0
  %198 = vmatpush1.bf16.msra.mxu0 %v175
  %199 = vmatprep.subr.bf16.mxu0 0
  %200 = vmatpush2.bf16.msra.mxu0 0
  %201 = vmatprep.subr.bf16.mxu0 0
  %202 = vmatpush2.bf16.msra.mxu0 0
  %203 = vmatprep.subr.bf16.mxu0 0
  %204 = vmatpush2.bf16.msra.mxu0 0
  %205 = vmatprep.subr.bf16.mxu0 0
  %206 = vmatpush2.bf16.msra.mxu0 0
  %207 = vmatprep.subr.bf16.mxu0 0
  %208 = vmatpush2.bf16.msra.mxu0 0
  %209 = vmatprep.subr.bf16.mxu0 0
  %210 = vmatpush2.bf16.msra.mxu0 0
  %211 = vmatprep.subr.bf16.mxu0 0
  %212 = vmatpush2.bf16.msra.mxu0 0
  %213 = vmatprep.subr.bf16.mxu0 0
  %214 = vmatpush2.bf16.msra.mxu0 0
  %215 = vmatprep.mubr.bf16.mxu0 0
  %216 = vmatmul.mubr.bf16.gmra.mxu0 %v181
  %v217 = vpop.f32.mrf.mxu0
  %v218 = vadd.f32 0.0, %v217
  %v219 = vpop.f32.mrf.mxu0
  %v220 = vpop.f32.mrf.mxu0
  %v221 = vpop.f32.mrf.mxu0
  %222 = vdwg.mxu0
  %v223 = vadd.f32 %v132, %v218
  %v224 = vxor.u32 %v223, 2147483648
  %v225 = vmul.f32 %v224, 1.442695
  %v226 = vpow.pop %v225
  %v227 = vadd.f32 %v226, 1.0
  %v228 = vrcp.pop %v227
  %v229 = vmul.f32 1.0, %v228
  %230 = vrot.lane.b32.xlu0 %v166, 64
  %v231 = vpop.permute.xlu0 %230
  %v233 = vadd.f32 %v218, %v231
  %235 = vrot.lane.b32.xlu0 %v233, 64
  %v236 = vpop.permute.xlu0 %235
  %v238 = vmul.f32 %v229, %v236
  %240 = vrot.lane.b32.xlu0 %v238, 64
  %v241 = vpop.permute.xlu0 %240
  %v243 = vadd.f32 %v132, %v241
  %v244 = vtanh.pop %v243
  %v245 = vsub.f32 0.0, %v244
  %247 = vrot.lane.b32.xlu0 %v245, 96
  %v248 = vpop.permute.xlu0 %247
  %v250 = vmul.f32 %v229, %v248
  %252 = vrot.lane.b32.xlu0 %v250, 32
  %v253 = vpop.permute.xlu0 %252
  %v255 = vadd.f32 %v244, %v253
  %257 = vrot.lane.b32.xlu0 %v255, 64
  %v258 = vpop.permute.xlu0 %257
  %260 = vst.msk [vmem:[#allocation2] sm:$0xff] %vm179, %v258
  %v261 = vpack.c.bf16 %v255, %v255
  %263 = vrot.lane.b32.xlu0 %v261, 64
  %v264 = vpop.permute.xlu0 %263
  %v266 = vsel %vm179, %v264, 0
  %268 = vmatprep.subr.bf16.mxu0 0
  %269 = vmatpush1.bf16.msra.mxu0 0
  %270 = vmatprep.subr.bf16.mxu0 0
  %271 = vmatpush1.bf16.msra.mxu0 0
  %272 = vmatprep.subr.bf16.mxu0 0
  %273 = vmatpush1.bf16.msra.mxu0 0
  %274 = vmatprep.subr.bf16.mxu0 0
  %275 = vmatpush1.bf16.msra.mxu0 0
  %276 = vmatprep.subr.bf16.mxu0 0
  %277 = vmatpush1.bf16.msra.mxu0 0
  %278 = vmatprep.subr.bf16.mxu0 0
  %279 = vmatpush1.bf16.msra.mxu0 0
  %280 = vmatprep.subr.bf16.mxu0 0
  %281 = vmatpush1.bf16.msra.mxu0 %v176
  %282 = vmatprep.subr.bf16.mxu0 0
  %283 = vmatpush1.bf16.msra.mxu0 %v175
  %284 = vmatprep.subr.bf16.mxu0 0
  %285 = vmatpush2.bf16.msra.mxu0 0
  %286 = vmatprep.subr.bf16.mxu0 0
  %287 = vmatpush2.bf16.msra.mxu0 0
  %288 = vmatprep.subr.bf16.mxu0 0
  %289 = vmatpush2.bf16.msra.mxu0 0
  %290 = vmatprep.subr.bf16.mxu0 0
  %291 = vmatpush2.bf16.msra.mxu0 0
  %292 = vmatprep.subr.bf16.mxu0 0
  %293 = vmatpush2.bf16.msra.mxu0 0
  %294 = vmatprep.subr.bf16.mxu0 0
  %295 = vmatpush2.bf16.msra.mxu0 0
  %296 = vmatprep.subr.bf16.mxu0 0
  %297 = vmatpush2.bf16.msra.mxu0 0
  %298 = vmatprep.subr.bf16.mxu0 0
  %299 = vmatpush2.bf16.msra.mxu0 0
  %300 = vmatprep.mubr.bf16.mxu0 0
  %301 = vmatmul.mubr.bf16.gmra.mxu0 %v266
  %v302 = vpop.f32.mrf.mxu0
  %v303 = vadd.f32 0.0, %v302
  %v304 = vpop.f32.mrf.mxu0
  %v305 = vpop.f32.mrf.mxu0
  %v306 = vpop.f32.mrf.mxu0
  %307 = vdwg.mxu0
  %v308 = vadd.f32 %v135, %v303
  %v309 = vxor.u32 %v308, 2147483648
  %v310 = vmul.f32 %v309, 1.442695
  %v311 = vpow.pop %v310
  %v312 = vadd.f32 %v311, 1.0
  %v313 = vrcp.pop %v312
  %v314 = vmul.f32 1.0, %v313
  %v315 = vadd.f32 %v303, %v231
  %317 = vrot.lane.b32.xlu0 %v315, 64
  %v318 = vpop.permute.xlu0 %317
  %v320 = vmul.f32 %v314, %v318
  %322 = vrot.lane.b32.xlu0 %v320, 64
  %v323 = vpop.permute.xlu0 %322
  %v325 = vadd.f32 %v135, %v323
  %v326 = vtanh.pop %v325
  %v327 = vsub.f32 %v255, %v326
  %329 = vrot.lane.b32.xlu0 %v327, 96
  %v330 = vpop.permute.xlu0 %329
  %v332 = vmul.f32 %v314, %v330
  %334 = vrot.lane.b32.xlu0 %v332, 32
  %v335 = vpop.permute.xlu0 %334
  %v337 = vadd.f32 %v326, %v335
  %339 = vrot.lane.b32.xlu0 %v337, 64
  %v340 = vpop.permute.xlu0 %339
  %342 = vst.msk [vmem:[#allocation2 + $0x8] sm:$0xff] %vm179, %v340
  %v343 = vpack.c.bf16 %v337, %v337
  %345 = vrot.lane.b32.xlu0 %v343, 64
  %v346 = vpop.permute.xlu0 %345
  %v348 = vsel %vm179, %v346, 0
  %350 = vmatprep.subr.bf16.mxu0 0
  %351 = vmatpush1.bf16.msra.mxu0 0
  %352 = vmatprep.subr.bf16.mxu0 0
  %353 = vmatpush1.bf16.msra.mxu0 0
  %354 = vmatprep.subr.bf16.mxu0 0
  %355 = vmatpush1.bf16.msra.mxu0 0
  %356 = vmatprep.subr.bf16.mxu0 0
  %357 = vmatpush1.bf16.msra.mxu0 0
  %358 = vmatprep.subr.bf16.mxu0 0
  %359 = vmatpush1.bf16.msra.mxu0 0
  %360 = vmatprep.subr.bf16.mxu0 0
  %361 = vmatpush1.bf16.msra.mxu0 0
  %362 = vmatprep.subr.bf16.mxu0 0
  %363 = vmatpush1.bf16.msra.mxu0 %v176
  %364 = vmatprep.subr.bf16.mxu0 0
  %365 = vmatpush1.bf16.msra.mxu0 %v175
  %366 = vmatprep.subr.bf16.mxu0 0
  %367 = vmatpush2.bf16.msra.mxu0 0
  %368 = vmatprep.subr.bf16.mxu0 0
  %369 = vmatpush2.bf16.msra.mxu0 0
  %370 = vmatprep.subr.bf16.mxu0 0
  %371 = vmatpush2.bf16.msra.mxu0 0
  %372 = vmatprep.subr.bf16.mxu0 0
  %373 = vmatpush2.bf16.msra.mxu0 0
  %374 = vmatprep.subr.bf16.mxu0 0
  %375 = vmatpush2.bf16.msra.mxu0 0
  %376 = vmatprep.subr.bf16.mxu0 0
  %377 = vmatpush2.bf16.msra.mxu0 0
  %378 = vmatprep.subr.bf16.mxu0 0
  %379 = vmatpush2.bf16.msra.mxu0 0
  %380 = vmatprep.subr.bf16.mxu0 0
  %381 = vmatpush2.bf16.msra.mxu0 0
  %382 = vmatprep.mubr.bf16.mxu0 0
  %383 = vmatmul.mubr.bf16.gmra.mxu0 %v348
  %v384 = vpop.f32.mrf.mxu0
  %v385 = vadd.f32 0.0, %v384
  %v386 = vpop.f32.mrf.mxu0
  %v387 = vpop.f32.mrf.mxu0
  %v388 = vpop.f32.mrf.mxu0
  %389 = vdwg.mxu0
  %v390 = vadd.f32 %v140, %v385
  %v391 = vxor.u32 %v390, 2147483648
  %v392 = vmul.f32 %v391, 1.442695
  %v393 = vpow.pop %v392
  %v394 = vadd.f32 %v393, 1.0
  %v395 = vrcp.pop %v394
  %v396 = vmul.f32 1.0, %v395
  %v397 = vadd.f32 %v385, %v231
  %399 = vrot.lane.b32.xlu0 %v397, 64
  %v400 = vpop.permute.xlu0 %399
  %v402 = vmul.f32 %v396, %v400
  %404 = vrot.lane.b32.xlu0 %v402, 64
  %v405 = vpop.permute.xlu0 %404
  %v407 = vadd.f32 %v140, %v405
  %v408 = vtanh.pop %v407
  %v409 = vsub.f32 %v337, %v408
  %411 = vrot.lane.b32.xlu0 %v409, 96
  %v412 = vpop.permute.xlu0 %411
  %v414 = vmul.f32 %v396, %v412
  %416 = vrot.lane.b32.xlu0 %v414, 32
  %v417 = vpop.permute.xlu0 %416
  %v419 = vadd.f32 %v408, %v417
  %421 = vrot.lane.b32.xlu0 %v419, 64
  %v422 = vpop.permute.xlu0 %421
  %424 = vst.msk [vmem:[#allocation2 + $0x10] sm:$0xff] %vm179, %v422
  %v425 = vpack.c.bf16 %v419, %v419
  %427 = vrot.lane.b32.xlu0 %v425, 64
  %v428 = vpop.permute.xlu0 %427
  %v430 = vsel %vm179, %v428, 0
  %432 = vmatprep.subr.bf16.mxu0 0
  %433 = vmatpush1.bf16.msra.mxu0 0
  %434 = vmatprep.subr.bf16.mxu0 0
  %435 = vmatpush1.bf16.msra.mxu0 0
  %436 = vmatprep.subr.bf16.mxu0 0
  %437 = vmatpush1.bf16.msra.mxu0 0
  %438 = vmatprep.subr.bf16.mxu0 0
  %439 = vmatpush1.bf16.msra.mxu0 0
  %440 = vmatprep.subr.bf16.mxu0 0
  %441 = vmatpush1.bf16.msra.mxu0 0
  %442 = vmatprep.subr.bf16.mxu0 0
  %443 = vmatpush1.bf16.msra.mxu0 0
  %444 = vmatprep.subr.bf16.mxu0 0
  %445 = vmatpush1.bf16.msra.mxu0 %v176
  %446 = vmatprep.subr.bf16.mxu0 0
  %447 = vmatpush1.bf16.msra.mxu0 %v175
  %448 = vmatprep.subr.bf16.mxu0 0
  %449 = vmatpush2.bf16.msra.mxu0 0
  %450 = vmatprep.subr.bf16.mxu0 0
  %451 = vmatpush2.bf16.msra.mxu0 0
  %452 = vmatprep.subr.bf16.mxu0 0
  %453 = vmatpush2.bf16.msra.mxu0 0
  %454 = vmatprep.subr.bf16.mxu0 0
  %455 = vmatpush2.bf16.msra.mxu0 0
  %456 = vmatprep.subr.bf16.mxu0 0
  %457 = vmatpush2.bf16.msra.mxu0 0
  %458 = vmatprep.subr.bf16.mxu0 0
  %459 = vmatpush2.bf16.msra.mxu0 0
  %460 = vmatprep.subr.bf16.mxu0 0
  %461 = vmatpush2.bf16.msra.mxu0 0
  %462 = vmatprep.subr.bf16.mxu0 0
  %463 = vmatpush2.bf16.msra.mxu0 0
  %464 = vmatprep.mubr.bf16.mxu0 0
  %465 = vmatmul.mubr.bf16.gmra.mxu0 %v430
  %v466 = vpop.f32.mrf.mxu0
  %v467 = vadd.f32 0.0, %v466
  %v468 = vpop.f32.mrf.mxu0
  %v469 = vpop.f32.mrf.mxu0
  %v470 = vpop.f32.mrf.mxu0
  %471 = vdwg.mxu0
  %v472 = vadd.f32 %v143, %v467
  %v473 = vxor.u32 %v472, 2147483648
  %v474 = vmul.f32 %v473, 1.442695
  %v475 = vpow.pop %v474
  %v476 = vadd.f32 %v475, 1.0
  %v477 = vrcp.pop %v476
  %v478 = vmul.f32 1.0, %v477
  %v479 = vadd.f32 %v467, %v231
  %481 = vrot.lane.b32.xlu0 %v479, 64
  %v482 = vpop.permute.xlu0 %481
  %v484 = vmul.f32 %v478, %v482
  %486 = vrot.lane.b32.xlu0 %v484, 64
  %v487 = vpop.permute.xlu0 %486
  %v489 = vadd.f32 %v143, %v487
  %v490 = vtanh.pop %v489
  %v491 = vsub.f32 %v419, %v490
  %493 = vrot.lane.b32.xlu0 %v491, 96
  %v494 = vpop.permute.xlu0 %493
  %v496 = vmul.f32 %v478, %v494
  %498 = vrot.lane.b32.xlu0 %v496, 32
  %v499 = vpop.permute.xlu0 %498
  %v501 = vadd.f32 %v490, %v499
  %503 = vrot.lane.b32.xlu0 %v501, 64
  %v504 = vpop.permute.xlu0 %503
  %506 = vst.msk [vmem:[#allocation2 + $0x18] sm:$0xff] %vm179, %v504
  %v507 = vpack.c.bf16 %v501, %v501
  %509 = vrot.lane.b32.xlu0 %v507, 64
  %v510 = vpop.permute.xlu0 %509
  %v512 = vsel %vm179, %v510, 0
  %514 = vmatprep.subr.bf16.mxu0 0
  %515 = vmatpush1.bf16.msra.mxu0 0
  %516 = vmatprep.subr.bf16.mxu0 0
  %517 = vmatpush1.bf16.msra.mxu0 0
  %518 = vmatprep.subr.bf16.mxu0 0
  %519 = vmatpush1.bf16.msra.mxu0 0
  %520 = vmatprep.subr.bf16.mxu0 0
  %521 = vmatpush1.bf16.msra.mxu0 0
  %522 = vmatprep.subr.bf16.mxu0 0
  %523 = vmatpush1.bf16.msra.mxu0 0
  %524 = vmatprep.subr.bf16.mxu0 0
  %525 = vmatpush1.bf16.msra.mxu0 0
  %526 = vmatprep.subr.bf16.mxu0 0
  %527 = vmatpush1.bf16.msra.mxu0 %v176
  %528 = vmatprep.subr.bf16.mxu0 0
  %529 = vmatpush1.bf16.msra.mxu0 %v175
  %530 = vmatprep.subr.bf16.mxu0 0
  %531 = vmatpush2.bf16.msra.mxu0 0
  %532 = vmatprep.subr.bf16.mxu0 0
  %533 = vmatpush2.bf16.msra.mxu0 0
  %534 = vmatprep.subr.bf16.mxu0 0
  %535 = vmatpush2.bf16.msra.mxu0 0
  %536 = vmatprep.subr.bf16.mxu0 0
  %537 = vmatpush2.bf16.msra.mxu0 0
  %538 = vmatprep.subr.bf16.mxu0 0
  %539 = vmatpush2.bf16.msra.mxu0 0
  %540 = vmatprep.subr.bf16.mxu0 0
  %541 = vmatpush2.bf16.msra.mxu0 0
  %542 = vmatprep.subr.bf16.mxu0 0
  %543 = vmatpush2.bf16.msra.mxu0 0
  %544 = vmatprep.subr.bf16.mxu0 0
  %545 = vmatpush2.bf16.msra.mxu0 0
  %546 = vmatprep.mubr.bf16.mxu0 0
  %547 = vmatmul.mubr.bf16.gmra.mxu0 %v512
  %v548 = vpop.f32.mrf.mxu0
  %v549 = vadd.f32 0.0, %v548
  %v550 = vpop.f32.mrf.mxu0
  %v551 = vpop.f32.mrf.mxu0
  %v552 = vpop.f32.mrf.mxu0
  %553 = vdwg.mxu0
  %v554 = vadd.f32 %v148, %v549
  %v555 = vxor.u32 %v554, 2147483648
  %v556 = vmul.f32 %v555, 1.442695
  %v557 = vpow.pop %v556
  %v558 = vadd.f32 %v557, 1.0
  %v559 = vrcp.pop %v558
  %v560 = vmul.f32 1.0, %v559
  %v561 = vadd.f32 %v549, %v231
  %563 = vrot.lane.b32.xlu0 %v561, 64
  %v564 = vpop.permute.xlu0 %563
  %v566 = vmul.f32 %v560, %v564
  %568 = vrot.lane.b32.xlu0 %v566, 64
  %v569 = vpop.permute.xlu0 %568
  %v571 = vadd.f32 %v148, %v569
  %v572 = vtanh.pop %v571
  %v573 = vsub.f32 %v501, %v572
  %575 = vrot.lane.b32.xlu0 %v573, 96
  %v576 = vpop.permute.xlu0 %575
  %v578 = vmul.f32 %v560, %v576
  %580 = vrot.lane.b32.xlu0 %v578, 32
  %v581 = vpop.permute.xlu0 %580
  %v583 = vadd.f32 %v572, %v581
  %585 = vrot.lane.b32.xlu0 %v583, 64
  %v586 = vpop.permute.xlu0 %585
  %588 = vst.msk [vmem:[#allocation2 + $0x20] sm:$0xff] %vm179, %v586
  %v589 = vpack.c.bf16 %v583, %v583
  %591 = vrot.lane.b32.xlu0 %v589, 64
  %v592 = vpop.permute.xlu0 %591
  %v594 = vsel %vm179, %v592, 0
  %596 = vmatprep.subr.bf16.mxu0 0
  %597 = vmatpush1.bf16.msra.mxu0 0
  %598 = vmatprep.subr.bf16.mxu0 0
  %599 = vmatpush1.bf16.msra.mxu0 0
  %600 = vmatprep.subr.bf16.mxu0 0
  %601 = vmatpush1.bf16.msra.mxu0 0
  %602 = vmatprep.subr.bf16.mxu0 0
  %603 = vmatpush1.bf16.msra.mxu0 0
  %604 = vmatprep.subr.bf16.mxu0 0
  %605 = vmatpush1.bf16.msra.mxu0 0
  %606 = vmatprep.subr.bf16.mxu0 0
  %607 = vmatpush1.bf16.msra.mxu0 0
  %608 = vmatprep.subr.bf16.mxu0 0
  %609 = vmatpush1.bf16.msra.mxu0 %v176
  %610 = vmatprep.subr.bf16.mxu0 0
  %611 = vmatpush1.bf16.msra.mxu0 %v175
  %612 = vmatprep.subr.bf16.mxu0 0
  %613 = vmatpush2.bf16.msra.mxu0 0
  %614 = vmatprep.subr.bf16.mxu0 0
  %615 = vmatpush2.bf16.msra.mxu0 0
  %616 = vmatprep.subr.bf16.mxu0 0
  %617 = vmatpush2.bf16.msra.mxu0 0
  %618 = vmatprep.subr.bf16.mxu0 0
  %619 = vmatpush2.bf16.msra.mxu0 0
  %620 = vmatprep.subr.bf16.mxu0 0
  %621 = vmatpush2.bf16.msra.mxu0 0
  %622 = vmatprep.subr.bf16.mxu0 0
  %623 = vmatpush2.bf16.msra.mxu0 0
  %624 = vmatprep.subr.bf16.mxu0 0
  %625 = vmatpush2.bf16.msra.mxu0 0
  %626 = vmatprep.subr.bf16.mxu0 0
  %627 = vmatpush2.bf16.msra.mxu0 0
  %628 = vmatprep.mubr.bf16.mxu0 0
  %629 = vmatmul.mubr.bf16.gmra.mxu0 %v594
  %v630 = vpop.f32.mrf.mxu0
  %v631 = vadd.f32 0.0, %v630
  %v632 = vpop.f32.mrf.mxu0
  %v633 = vpop.f32.mrf.mxu0
  %v634 = vpop.f32.mrf.mxu0
  %635 = vdwg.mxu0
  %v636 = vadd.f32 %v151, %v631
  %v637 = vxor.u32 %v636, 2147483648
  %v638 = vmul.f32 %v637, 1.442695
  %v639 = vpow.pop %v638
  %v640 = vadd.f32 %v639, 1.0
  %v641 = vrcp.pop %v640
  %v642 = vmul.f32 1.0, %v641
  %v643 = vadd.f32 %v631, %v231
  %645 = vrot.lane.b32.xlu0 %v643, 64
  %v646 = vpop.permute.xlu0 %645
  %v648 = vmul.f32 %v642, %v646
  %650 = vrot.lane.b32.xlu0 %v648, 64
  %v651 = vpop.permute.xlu0 %650
  %v653 = vadd.f32 %v151, %v651
  %v654 = vtanh.pop %v653
  %v655 = vsub.f32 %v583, %v654
  %657 = vrot.lane.b32.xlu0 %v655, 96
  %v658 = vpop.permute.xlu0 %657
  %v660 = vmul.f32 %v642, %v658
  %662 = vrot.lane.b32.xlu0 %v660, 32
  %v663 = vpop.permute.xlu0 %662
  %v665 = vadd.f32 %v654, %v663
  %667 = vrot.lane.b32.xlu0 %v665, 64
  %v668 = vpop.permute.xlu0 %667
  %670 = vst.msk [vmem:[#allocation2 + $0x28] sm:$0xff] %vm179, %v668
  %v671 = vpack.c.bf16 %v665, %v665
  %673 = vrot.lane.b32.xlu0 %v671, 64
  %v674 = vpop.permute.xlu0 %673
  %v676 = vsel %vm179, %v674, 0
  %678 = vmatprep.subr.bf16.mxu0 0
  %679 = vmatpush1.bf16.msra.mxu0 0
  %680 = vmatprep.subr.bf16.mxu0 0
  %681 = vmatpush1.bf16.msra.mxu0 0
  %682 = vmatprep.subr.bf16.mxu0 0
  %683 = vmatpush1.bf16.msra.mxu0 0
  %684 = vmatprep.subr.bf16.mxu0 0
  %685 = vmatpush1.bf16.msra.mxu0 0
  %686 = vmatprep.subr.bf16.mxu0 0
  %687 = vmatpush1.bf16.msra.mxu0 0
  %688 = vmatprep.subr.bf16.mxu0 0
  %689 = vmatpush1.bf16.msra.mxu0 0
  %690 = vmatprep.subr.bf16.mxu0 0
  %691 = vmatpush1.bf16.msra.mxu0 %v176
  %692 = vmatprep.subr.bf16.mxu0 0
  %693 = vmatpush1.bf16.msra.mxu0 %v175
  %694 = vmatprep.subr.bf16.mxu0 0
  %695 = vmatpush2.bf16.msra.mxu0 0
  %696 = vmatprep.subr.bf16.mxu0 0
  %697 = vmatpush2.bf16.msra.mxu0 0
  %698 = vmatprep.subr.bf16.mxu0 0
  %699 = vmatpush2.bf16.msra.mxu0 0
  %700 = vmatprep.subr.bf16.mxu0 0
  %701 = vmatpush2.bf16.msra.mxu0 0
  %702 = vmatprep.subr.bf16.mxu0 0
  %703 = vmatpush2.bf16.msra.mxu0 0
  %704 = vmatprep.subr.bf16.mxu0 0
  %705 = vmatpush2.bf16.msra.mxu0 0
  %706 = vmatprep.subr.bf16.mxu0 0
  %707 = vmatpush2.bf16.msra.mxu0 0
  %708 = vmatprep.subr.bf16.mxu0 0
  %709 = vmatpush2.bf16.msra.mxu0 0
  %710 = vmatprep.mubr.bf16.mxu0 0
  %711 = vmatmul.mubr.bf16.gmra.mxu0 %v676
  %v712 = vpop.f32.mrf.mxu0
  %v713 = vadd.f32 0.0, %v712
  %v714 = vpop.f32.mrf.mxu0
  %v715 = vpop.f32.mrf.mxu0
  %v716 = vpop.f32.mrf.mxu0
  %717 = vdwg.mxu0
  %v718 = vadd.f32 %v156, %v713
  %v719 = vxor.u32 %v718, 2147483648
  %v720 = vmul.f32 %v719, 1.442695
  %v721 = vpow.pop %v720
  %v722 = vadd.f32 %v721, 1.0
  %v723 = vrcp.pop %v722
  %v724 = vmul.f32 1.0, %v723
  %v725 = vadd.f32 %v713, %v231
  %727 = vrot.lane.b32.xlu0 %v725, 64
  %v728 = vpop.permute.xlu0 %727
  %v730 = vmul.f32 %v724, %v728
  %732 = vrot.lane.b32.xlu0 %v730, 64
  %v733 = vpop.permute.xlu0 %732
  %v735 = vadd.f32 %v156, %v733
  %v736 = vtanh.pop %v735
  %v737 = vsub.f32 %v665, %v736
  %739 = vrot.lane.b32.xlu0 %v737, 96
  %v740 = vpop.permute.xlu0 %739
  %v742 = vmul.f32 %v724, %v740
  %744 = vrot.lane.b32.xlu0 %v742, 32
  %v745 = vpop.permute.xlu0 %744
  %v747 = vadd.f32 %v736, %v745
  %749 = vrot.lane.b32.xlu0 %v747, 64
  %v750 = vpop.permute.xlu0 %749
  %752 = vst.msk [vmem:[#allocation2 + $0x30] sm:$0xff] %vm179, %v750
  %v753 = vpack.c.bf16 %v747, %v747
  %755 = vrot.lane.b32.xlu0 %v753, 64
  %v756 = vpop.permute.xlu0 %755
  %v758 = vsel %vm179, %v756, 0
  %760 = vmatprep.subr.bf16.mxu0 0
  %761 = vmatpush1.bf16.msra.mxu0 0
  %762 = vmatprep.subr.bf16.mxu0 0
  %763 = vmatpush1.bf16.msra.mxu0 0
  %764 = vmatprep.subr.bf16.mxu0 0
  %765 = vmatpush1.bf16.msra.mxu0 0
  %766 = vmatprep.subr.bf16.mxu0 0
  %767 = vmatpush1.bf16.msra.mxu0 0
  %768 = vmatprep.subr.bf16.mxu0 0
  %769 = vmatpush1.bf16.msra.mxu0 0
  %770 = vmatprep.subr.bf16.mxu0 0
  %771 = vmatpush1.bf16.msra.mxu0 0
  %772 = vmatprep.subr.bf16.mxu0 0
  %773 = vmatpush1.bf16.msra.mxu0 %v176
  %774 = vmatprep.subr.bf16.mxu0 0
  %775 = vmatpush1.bf16.msra.mxu0 %v175
  %776 = vmatprep.subr.bf16.mxu0 0
  %777 = vmatpush2.bf16.msra.mxu0 0
  %778 = vmatprep.subr.bf16.mxu0 0
  %779 = vmatpush2.bf16.msra.mxu0 0
  %780 = vmatprep.subr.bf16.mxu0 0
  %781 = vmatpush2.bf16.msra.mxu0 0
  %782 = vmatprep.subr.bf16.mxu0 0
  %783 = vmatpush2.bf16.msra.mxu0 0
  %784 = vmatprep.subr.bf16.mxu0 0
  %785 = vmatpush2.bf16.msra.mxu0 0
  %786 = vmatprep.subr.bf16.mxu0 0
  %787 = vmatpush2.bf16.msra.mxu0 0
  %788 = vmatprep.subr.bf16.mxu0 0
  %789 = vmatpush2.bf16.msra.mxu0 0
  %790 = vmatprep.subr.bf16.mxu0 0
  %791 = vmatpush2.bf16.msra.mxu0 0
  %792 = vmatprep.mubr.bf16.mxu0 0
  %793 = vmatmul.mubr.bf16.gmra.mxu0 %v758
  %v794 = vpop.f32.mrf.mxu0
  %v795 = vadd.f32 0.0, %v794
  %v796 = vpop.f32.mrf.mxu0
  %v797 = vpop.f32.mrf.mxu0
  %v798 = vpop.f32.mrf.mxu0
  %799 = vdwg.mxu0
  %v800 = vadd.f32 %v159, %v795
  %v801 = vxor.u32 %v800, 2147483648
  %v802 = vmul.f32 %v801, 1.442695
  %v803 = vpow.pop %v802
  %v804 = vadd.f32 %v803, 1.0
  %v805 = vrcp.pop %v804
  %v806 = vmul.f32 1.0, %v805
  %v807 = vadd.f32 %v795, %v231
  %809 = vrot.lane.b32.xlu0 %v807, 64
  %v810 = vpop.permute.xlu0 %809
  %v812 = vmul.f32 %v806, %v810
  %814 = vrot.lane.b32.xlu0 %v812, 64
  %v815 = vpop.permute.xlu0 %814
  %v817 = vadd.f32 %v159, %v815
  %v818 = vtanh.pop %v817
  %v819 = vsub.f32 %v747, %v818
  %821 = vrot.lane.b32.xlu0 %v819, 96
  %v822 = vpop.permute.xlu0 %821
  %v824 = vmul.f32 %v806, %v822
  %826 = vrot.lane.b32.xlu0 %v824, 32
  %v827 = vpop.permute.xlu0 %826
  %v829 = vadd.f32 %v818, %v827
  %831 = vrot.lane.b32.xlu0 %v829, 64
  %v832 = vpop.permute.xlu0 %831
  %834 = vst.msk [vmem:[#allocation2 + $0x38] sm:$0xff] %vm179, %v832
  %v835 = vld [vmem:[#allocation2] sm:$0xff]
  %v836 = vld [vmem:[#allocation2 + $0x8] sm:$0xff]
  %v837 = vld [vmem:[#allocation2 + $0x10] sm:$0xff]
  %v838 = vld [vmem:[#allocation2 + $0x18] sm:$0xff]
  %v839 = vld [vmem:[#allocation2 + $0x20] sm:$0xff]
  %v840 = vld [vmem:[#allocation2 + $0x28] sm:$0xff]
  %v841 = vld [vmem:[#allocation2 + $0x30] sm:$0xff]
  %v842 = vld [vmem:[#allocation2 + $0x38] sm:$0xff]
  %v843 = vpack.c.bf16 %v836, %v835
  %v844 = vpack.c.bf16 %v838, %v837
  %v845 = vpack.c.bf16 %v840, %v839
  %v846 = vpack.c.bf16 %v842, %v841
  %v847 = vld [vmem:[%s5] sm:$0xf]
  %v848 = vld [vmem:[%s5 + $0x4] sm:$0xf]
  %v849 = vld [vmem:[%s5 + $0x8] sm:$0xf]
  %v850 = vld [vmem:[%s5 + $0xc] sm:$0xf]
  %v851 = vld [vmem:[%s6] sm:$0xf]
  %v852 = vld [vmem:[%s6 + $0x4] sm:$0xf]
  %v853 = vld [vmem:[%s6 + $0x8] sm:$0xf]
  %v854 = vld [vmem:[%s6 + $0xc] sm:$0xf]
  %v855 = vld [vmem:[%s7] sm:$0x1]
  %v856 = vld [vmem:[%s8] sm:$0x1]
  %v858 = vlaneseq
  %v859 = vshrl.u32 %v858, 7
  %v860 = vsub.s32 0, %v859
  %v861 = vrot.slane %v855, %v860
  %v867 = vunpack.c.l.b16 %v847
  %v868 = vunpack.c.l.b16 %v848
  %v869 = vunpack.c.l.b16 %v849
  %v870 = vunpack.c.l.b16 %v850
  %v871 = vpack.c.b16 %v868, %v867
  %v872 = vpack.c.b16 %v870, %v869
  %v876 = vsel %vm179, %v843, 0
  %v879 = vsel %vm179, %v844, 0
  %v882 = vsel %vm179, %v845, 0
  %v885 = vsel %vm179, %v846, 0
  %887 = vmatprep.subr.bf16.mxu0 0
  %888 = vmatpush1.bf16.msra.mxu0 0
  %889 = vmatprep.subr.bf16.mxu0 0
  %890 = vmatpush1.bf16.msra.mxu0 0
  %891 = vmatprep.subr.bf16.mxu0 0
  %892 = vmatpush1.bf16.msra.mxu0 0
  %893 = vmatprep.subr.bf16.mxu0 0
  %894 = vmatpush1.bf16.msra.mxu0 0
  %895 = vmatprep.subr.bf16.mxu0 0
  %896 = vmatpush1.bf16.msra.mxu0 0
  %897 = vmatprep.subr.bf16.mxu0 0
  %898 = vmatpush1.bf16.msra.mxu0 0
  %899 = vmatprep.subr.bf16.mxu0 0
  %900 = vmatpush1.bf16.msra.mxu0 %v872
  %901 = vmatprep.subr.bf16.mxu0 0
  %902 = vmatpush1.bf16.msra.mxu0 %v871
  %903 = vmatprep.subr.bf16.mxu0 0
  %904 = vmatpush2.bf16.msra.mxu0 0
  %905 = vmatprep.subr.bf16.mxu0 0
  %906 = vmatpush2.bf16.msra.mxu0 0
  %907 = vmatprep.subr.bf16.mxu0 0
  %908 = vmatpush2.bf16.msra.mxu0 0
  %909 = vmatprep.subr.bf16.mxu0 0
  %910 = vmatpush2.bf16.msra.mxu0 0
  %911 = vmatprep.subr.bf16.mxu0 0
  %912 = vmatpush2.bf16.msra.mxu0 0
  %913 = vmatprep.subr.bf16.mxu0 0
  %914 = vmatpush2.bf16.msra.mxu0 0
  %915 = vmatprep.subr.bf16.mxu0 0
  %916 = vmatpush2.bf16.msra.mxu0 0
  %917 = vmatprep.subr.bf16.mxu0 0
  %918 = vmatpush2.bf16.msra.mxu0 0
  %919 = vmatprep.mubr.bf16.mxu0 0
  %920 = vmatmul.mubr.bf16.gmra.mxu0 %v876
  %v921 = vpop.f32.mrf.mxu0
  %v922 = vadd.f32 %v861, %v921
  %v923 = vpop.f32.mrf.mxu0
  %v924 = vpop.f32.mrf.mxu0
  %v925 = vadd.f32 %v861, %v924
  %v926 = vpop.f32.mrf.mxu0
  %927 = vmatprep.mubr.bf16.mxu0 0
  %928 = vmatmul.mubr.bf16.gmra.mxu0 %v879
  %v929 = vpop.f32.mrf.mxu0
  %v930 = vadd.f32 %v861, %v929
  %v931 = vpop.f32.mrf.mxu0
  %v932 = vpop.f32.mrf.mxu0
  %v933 = vadd.f32 %v861, %v932
  %v934 = vpop.f32.mrf.mxu0
  %935 = vmatprep.mubr.bf16.mxu0 0
  %936 = vmatmul.mubr.bf16.gmra.mxu0 %v882
  %v937 = vpop.f32.mrf.mxu0
  %v938 = vadd.f32 %v861, %v937
  %v939 = vpop.f32.mrf.mxu0
  %v940 = vpop.f32.mrf.mxu0
  %v941 = vadd.f32 %v861, %v940
  %v942 = vpop.f32.mrf.mxu0
  %943 = vmatprep.mubr.bf16.mxu0 0
  %944 = vmatmul.mubr.bf16.gmra.mxu0 %v885
  %v945 = vpop.f32.mrf.mxu0
  %v946 = vadd.f32 %v861, %v945
  %v947 = vpop.f32.mrf.mxu0
  %v948 = vpop.f32.mrf.mxu0
  %v949 = vadd.f32 %v861, %v948
  %v950 = vpop.f32.mrf.mxu0
  %951 = vdwg.mxu0
  %v953 = vlaneseq
  %v954 = vshrl.u32 %v953, 7
  %v955 = vsub.s32 0, %v954
  %v956 = vrot.slane %v856, %v955
  %v961 = vunpack.c.l.b16 %v851
  %v962 = vunpack.c.l.b16 %v852
  %v963 = vunpack.c.l.b16 %v853
  %v964 = vunpack.c.l.b16 %v854
  %v965 = vpack.c.b16 %v962, %v961
  %v966 = vpack.c.b16 %v964, %v963
  %969 = vmatprep.subr.bf16.mxu0 0
  %970 = vmatpush1.bf16.msra.mxu0 0
  %971 = vmatprep.subr.bf16.mxu0 0
  %972 = vmatpush1.bf16.msra.mxu0 0
  %973 = vmatprep.subr.bf16.mxu0 0
  %974 = vmatpush1.bf16.msra.mxu0 0
  %975 = vmatprep.subr.bf16.mxu0 0
  %976 = vmatpush1.bf16.msra.mxu0 0
  %977 = vmatprep.subr.bf16.mxu0 0
  %978 = vmatpush1.bf16.msra.mxu0 0
  %979 = vmatprep.subr.bf16.mxu0 0
  %980 = vmatpush1.bf16.msra.mxu0 0
  %981 = vmatprep.subr.bf16.mxu0 0
  %982 = vmatpush1.bf16.msra.mxu0 %v966
  %983 = vmatprep.subr.bf16.mxu0 0
  %984 = vmatpush1.bf16.msra.mxu0 %v965
  %985 = vmatprep.subr.bf16.mxu0 0
  %986 = vmatpush2.bf16.msra.mxu0 0
  %987 = vmatprep.subr.bf16.mxu0 0
  %988 = vmatpush2.bf16.msra.mxu0 0
  %989 = vmatprep.subr.bf16.mxu0 0
  %990 = vmatpush2.bf16.msra.mxu0 0
  %991 = vmatprep.subr.bf16.mxu0 0
  %992 = vmatpush2.bf16.msra.mxu0 0
  %993 = vmatprep.subr.bf16.mxu0 0
  %994 = vmatpush2.bf16.msra.mxu0 0
  %995 = vmatprep.subr.bf16.mxu0 0
  %996 = vmatpush2.bf16.msra.mxu0 0
  %997 = vmatprep.subr.bf16.mxu0 0
  %998 = vmatpush2.bf16.msra.mxu0 0
  %999 = vmatprep.subr.bf16.mxu0 0
  %1000 = vmatpush2.bf16.msra.mxu0 0
  %1001 = vmatprep.mubr.bf16.mxu0 0
  %1002 = vmatmul.mubr.bf16.gmra.mxu0 %v181
  %v1003 = vpop.f32.mrf.mxu0
  %v1004 = vadd.f32 0.0, %v1003
  %v1005 = vpop.f32.mrf.mxu0
  %v1006 = vpop.f32.mrf.mxu0
  %v1007 = vpop.f32.mrf.mxu0
  %1008 = vdwg.mxu0
  %v1009 = vadd.f32 %v922, %v1004
  %v1010 = vxor.u32 %v1009, 2147483648
  %v1011 = vmul.f32 %v1010, 1.442695
  %v1012 = vpow.pop %v1011
  %v1013 = vadd.f32 %v1012, 1.0
  %v1014 = vrcp.pop %v1013
  %v1015 = vmul.f32 1.0, %v1014
  %1016 = vrot.lane.b32.xlu0 %v956, 64
  %v1017 = vpop.permute.xlu0 %1016
  %v1019 = vadd.f32 %v1004, %v1017
  %1021 = vrot.lane.b32.xlu0 %v1019, 64
  %v1022 = vpop.permute.xlu0 %1021
  %v1024 = vmul.f32 %v1015, %v1022
  %1026 = vrot.lane.b32.xlu0 %v1024, 64
  %v1027 = vpop.permute.xlu0 %1026
  %v1029 = vadd.f32 %v922, %v1027
  %v1030 = vtanh.pop %v1029
  %v1031 = vsub.f32 0.0, %v1030
  %1033 = vrot.lane.b32.xlu0 %v1031, 96
  %v1034 = vpop.permute.xlu0 %1033
  %v1036 = vmul.f32 %v1015, %v1034
  %1038 = vrot.lane.b32.xlu0 %v1036, 32
  %v1039 = vpop.permute.xlu0 %1038
  %v1041 = vadd.f32 %v1030, %v1039
  %v1042 = vpack.c.bf16 %v1041, %v1041
  %1044 = vrot.lane.b32.xlu0 %v1042, 64
  %v1045 = vpop.permute.xlu0 %1044
  %v1047 = vsel %vm179, %v1045, 0
  %1049 = vmatprep.subr.bf16.mxu0 0
  %1050 = vmatpush1.bf16.msra.mxu0 0
  %1051 = vmatprep.subr.bf16.mxu0 0
  %1052 = vmatpush1.bf16.msra.mxu0 0
  %1053 = vmatprep.subr.bf16.mxu0 0
  %1054 = vmatpush1.bf16.msra.mxu0 0
  %1055 = vmatprep.subr.bf16.mxu0 0
  %1056 = vmatpush1.bf16.msra.mxu0 0
  %1057 = vmatprep.subr.bf16.mxu0 0
  %1058 = vmatpush1.bf16.msra.mxu0 0
  %1059 = vmatprep.subr.bf16.mxu0 0
  %1060 = vmatpush1.bf16.msra.mxu0 0
  %1061 = vmatprep.subr.bf16.mxu0 0
  %1062 = vmatpush1.bf16.msra.mxu0 %v966
  %1063 = vmatprep.subr.bf16.mxu0 0
  %1064 = vmatpush1.bf16.msra.mxu0 %v965
  %1065 = vmatprep.subr.bf16.mxu0 0
  %1066 = vmatpush2.bf16.msra.mxu0 0
  %1067 = vmatprep.subr.bf16.mxu0 0
  %1068 = vmatpush2.bf16.msra.mxu0 0
  %1069 = vmatprep.subr.bf16.mxu0 0
  %1070 = vmatpush2.bf16.msra.mxu0 0
  %1071 = vmatprep.subr.bf16.mxu0 0
  %1072 = vmatpush2.bf16.msra.mxu0 0
  %1073 = vmatprep.subr.bf16.mxu0 0
  %1074 = vmatpush2.bf16.msra.mxu0 0
  %1075 = vmatprep.subr.bf16.mxu0 0
  %1076 = vmatpush2.bf16.msra.mxu0 0
  %1077 = vmatprep.subr.bf16.mxu0 0
  %1078 = vmatpush2.bf16.msra.mxu0 0
  %1079 = vmatprep.subr.bf16.mxu0 0
  %1080 = vmatpush2.bf16.msra.mxu0 0
  %1081 = vmatprep.mubr.bf16.mxu0 0
  %1082 = vmatmul.mubr.bf16.gmra.mxu0 %v1047
  %v1083 = vpop.f32.mrf.mxu0
  %v1084 = vadd.f32 0.0, %v1083
  %v1085 = vpop.f32.mrf.mxu0
  %v1086 = vpop.f32.mrf.mxu0
  %v1087 = vpop.f32.mrf.mxu0
  %1088 = vdwg.mxu0
  %v1089 = vadd.f32 %v925, %v1084
  %v1090 = vxor.u32 %v1089, 2147483648
  %v1091 = vmul.f32 %v1090, 1.442695
  %v1092 = vpow.pop %v1091
  %v1093 = vadd.f32 %v1092, 1.0
  %v1094 = vrcp.pop %v1093
  %v1095 = vmul.f32 1.0, %v1094
  %v1096 = vadd.f32 %v1084, %v1017
  %1098 = vrot.lane.b32.xlu0 %v1096, 64
  %v1099 = vpop.permute.xlu0 %1098
  %v1101 = vmul.f32 %v1095, %v1099
  %1103 = vrot.lane.b32.xlu0 %v1101, 64
  %v1104 = vpop.permute.xlu0 %1103
  %v1106 = vadd.f32 %v925, %v1104
  %v1107 = vtanh.pop %v1106
  %v1108 = vsub.f32 %v1041, %v1107
  %1110 = vrot.lane.b32.xlu0 %v1108, 96
  %v1111 = vpop.permute.xlu0 %1110
  %v1113 = vmul.f32 %v1095, %v1111
  %1115 = vrot.lane.b32.xlu0 %v1113, 32
  %v1116 = vpop.permute.xlu0 %1115
  %v1118 = vadd.f32 %v1107, %v1116
  %v1119 = vpack.c.bf16 %v1118, %v1118
  %1121 = vrot.lane.b32.xlu0 %v1119, 64
  %v1122 = vpop.permute.xlu0 %1121
  %v1124 = vsel %vm179, %v1122, 0
  %1126 = vmatprep.subr.bf16.mxu0 0
  %1127 = vmatpush1.bf16.msra.mxu0 0
  %1128 = vmatprep.subr.bf16.mxu0 0
  %1129 = vmatpush1.bf16.msra.mxu0 0
  %1130 = vmatprep.subr.bf16.mxu0 0
  %1131 = vmatpush1.bf16.msra.mxu0 0
  %1132 = vmatprep.subr.bf16.mxu0 0
  %1133 = vmatpush1.bf16.msra.mxu0 0
  %1134 = vmatprep.subr.bf16.mxu0 0
  %1135 = vmatpush1.bf16.msra.mxu0 0
  %1136 = vmatprep.subr.bf16.mxu0 0
  %1137 = vmatpush1.bf16.msra.mxu0 0
  %1138 = vmatprep.subr.bf16.mxu0 0
  %1139 = vmatpush1.bf16.msra.mxu0 %v966
  %1140 = vmatprep.subr.bf16.mxu0 0
  %1141 = vmatpush1.bf16.msra.mxu0 %v965
  %1142 = vmatprep.subr.bf16.mxu0 0
  %1143 = vmatpush2.bf16.msra.mxu0 0
  %1144 = vmatprep.subr.bf16.mxu0 0
  %1145 = vmatpush2.bf16.msra.mxu0 0
  %1146 = vmatprep.subr.bf16.mxu0 0
  %1147 = vmatpush2.bf16.msra.mxu0 0
  %1148 = vmatprep.subr.bf16.mxu0 0
  %1149 = vmatpush2.bf16.msra.mxu0 0
  %1150 = vmatprep.subr.bf16.mxu0 0
  %1151 = vmatpush2.bf16.msra.mxu0 0
  %1152 = vmatprep.subr.bf16.mxu0 0
  %1153 = vmatpush2.bf16.msra.mxu0 0
  %1154 = vmatprep.subr.bf16.mxu0 0
  %1155 = vmatpush2.bf16.msra.mxu0 0
  %1156 = vmatprep.subr.bf16.mxu0 0
  %1157 = vmatpush2.bf16.msra.mxu0 0
  %1158 = vmatprep.mubr.bf16.mxu0 0
  %1159 = vmatmul.mubr.bf16.gmra.mxu0 %v1124
  %v1160 = vpop.f32.mrf.mxu0
  %v1161 = vadd.f32 0.0, %v1160
  %v1162 = vpop.f32.mrf.mxu0
  %v1163 = vpop.f32.mrf.mxu0
  %v1164 = vpop.f32.mrf.mxu0
  %1165 = vdwg.mxu0
  %v1166 = vadd.f32 %v930, %v1161
  %v1167 = vxor.u32 %v1166, 2147483648
  %v1168 = vmul.f32 %v1167, 1.442695
  %v1169 = vpow.pop %v1168
  %v1170 = vadd.f32 %v1169, 1.0
  %v1171 = vrcp.pop %v1170
  %v1172 = vmul.f32 1.0, %v1171
  %v1173 = vadd.f32 %v1161, %v1017
  %1175 = vrot.lane.b32.xlu0 %v1173, 64
  %v1176 = vpop.permute.xlu0 %1175
  %v1178 = vmul.f32 %v1172, %v1176
  %1180 = vrot.lane.b32.xlu0 %v1178, 64
  %v1181 = vpop.permute.xlu0 %1180
  %v1183 = vadd.f32 %v930, %v1181
  %v1184 = vtanh.pop %v1183
  %v1185 = vsub.f32 %v1118, %v1184
  %1187 = vrot.lane.b32.xlu0 %v1185, 96
  %v1188 = vpop.permute.xlu0 %1187
  %v1190 = vmul.f32 %v1172, %v1188
  %1192 = vrot.lane.b32.xlu0 %v1190, 32
  %v1193 = vpop.permute.xlu0 %1192
  %v1195 = vadd.f32 %v1184, %v1193
  %v1196 = vpack.c.bf16 %v1195, %v1195
  %1198 = vrot.lane.b32.xlu0 %v1196, 64
  %v1199 = vpop.permute.xlu0 %1198
  %v1201 = vsel %vm179, %v1199, 0
  %1203 = vmatprep.subr.bf16.mxu0 0
  %1204 = vmatpush1.bf16.msra.mxu0 0
  %1205 = vmatprep.subr.bf16.mxu0 0
  %1206 = vmatpush1.bf16.msra.mxu0 0
  %1207 = vmatprep.subr.bf16.mxu0 0
  %1208 = vmatpush1.bf16.msra.mxu0 0
  %1209 = vmatprep.subr.bf16.mxu0 0
  %1210 = vmatpush1.bf16.msra.mxu0 0
  %1211 = vmatprep.subr.bf16.mxu0 0
  %1212 = vmatpush1.bf16.msra.mxu0 0
  %1213 = vmatprep.subr.bf16.mxu0 0
  %1214 = vmatpush1.bf16.msra.mxu0 0
  %1215 = vmatprep.subr.bf16.mxu0 0
  %1216 = vmatpush1.bf16.msra.mxu0 %v966
  %1217 = vmatprep.subr.bf16.mxu0 0
  %1218 = vmatpush1.bf16.msra.mxu0 %v965
  %1219 = vmatprep.subr.bf16.mxu0 0
  %1220 = vmatpush2.bf16.msra.mxu0 0
  %1221 = vmatprep.subr.bf16.mxu0 0
  %1222 = vmatpush2.bf16.msra.mxu0 0
  %1223 = vmatprep.subr.bf16.mxu0 0
  %1224 = vmatpush2.bf16.msra.mxu0 0
  %1225 = vmatprep.subr.bf16.mxu0 0
  %1226 = vmatpush2.bf16.msra.mxu0 0
  %1227 = vmatprep.subr.bf16.mxu0 0
  %1228 = vmatpush2.bf16.msra.mxu0 0
  %1229 = vmatprep.subr.bf16.mxu0 0
  %1230 = vmatpush2.bf16.msra.mxu0 0
  %1231 = vmatprep.subr.bf16.mxu0 0
  %1232 = vmatpush2.bf16.msra.mxu0 0
  %1233 = vmatprep.subr.bf16.mxu0 0
  %1234 = vmatpush2.bf16.msra.mxu0 0
  %1235 = vmatprep.mubr.bf16.mxu0 0
  %1236 = vmatmul.mubr.bf16.gmra.mxu0 %v1201
  %v1237 = vpop.f32.mrf.mxu0
  %v1238 = vadd.f32 0.0, %v1237
  %v1239 = vpop.f32.mrf.mxu0
  %v1240 = vpop.f32.mrf.mxu0
  %v1241 = vpop.f32.mrf.mxu0
  %1242 = vdwg.mxu0
  %v1243 = vadd.f32 %v933, %v1238
  %v1244 = vxor.u32 %v1243, 2147483648
  %v1245 = vmul.f32 %v1244, 1.442695
  %v1246 = vpow.pop %v1245
  %v1247 = vadd.f32 %v1246, 1.0
  %v1248 = vrcp.pop %v1247
  %v1249 = vmul.f32 1.0, %v1248
  %v1250 = vadd.f32 %v1238, %v1017
  %1252 = vrot.lane.b32.xlu0 %v1250, 64
  %v1253 = vpop.permute.xlu0 %1252
  %v1255 = vmul.f32 %v1249, %v1253
  %1257 = vrot.lane.b32.xlu0 %v1255, 64
  %v1258 = vpop.permute.xlu0 %1257
  %v1260 = vadd.f32 %v933, %v1258
  %v1261 = vtanh.pop %v1260
  %v1262 = vsub.f32 %v1195, %v1261
  %1264 = vrot.lane.b32.xlu0 %v1262, 96
  %v1265 = vpop.permute.xlu0 %1264
  %v1267 = vmul.f32 %v1249, %v1265
  %1269 = vrot.lane.b32.xlu0 %v1267, 32
  %v1270 = vpop.permute.xlu0 %1269
  %v1272 = vadd.f32 %v1261, %v1270
  %v1273 = vpack.c.bf16 %v1272, %v1272
  %1275 = vrot.lane.b32.xlu0 %v1273, 64
  %v1276 = vpop.permute.xlu0 %1275
  %v1278 = vsel %vm179, %v1276, 0
  %1280 = vmatprep.subr.bf16.mxu0 0
  %1281 = vmatpush1.bf16.msra.mxu0 0
  %1282 = vmatprep.subr.bf16.mxu0 0
  %1283 = vmatpush1.bf16.msra.mxu0 0
  %1284 = vmatprep.subr.bf16.mxu0 0
  %1285 = vmatpush1.bf16.msra.mxu0 0
  %1286 = vmatprep.subr.bf16.mxu0 0
  %1287 = vmatpush1.bf16.msra.mxu0 0
  %1288 = vmatprep.subr.bf16.mxu0 0
  %1289 = vmatpush1.bf16.msra.mxu0 0
  %1290 = vmatprep.subr.bf16.mxu0 0
  %1291 = vmatpush1.bf16.msra.mxu0 0
  %1292 = vmatprep.subr.bf16.mxu0 0
  %1293 = vmatpush1.bf16.msra.mxu0 %v966
  %1294 = vmatprep.subr.bf16.mxu0 0
  %1295 = vmatpush1.bf16.msra.mxu0 %v965
  %1296 = vmatprep.subr.bf16.mxu0 0
  %1297 = vmatpush2.bf16.msra.mxu0 0
  %1298 = vmatprep.subr.bf16.mxu0 0
  %1299 = vmatpush2.bf16.msra.mxu0 0
  %1300 = vmatprep.subr.bf16.mxu0 0
  %1301 = vmatpush2.bf16.msra.mxu0 0
  %1302 = vmatprep.subr.bf16.mxu0 0
  %1303 = vmatpush2.bf16.msra.mxu0 0
  %1304 = vmatprep.subr.bf16.mxu0 0
  %1305 = vmatpush2.bf16.msra.mxu0 0
  %1306 = vmatprep.subr.bf16.mxu0 0
  %1307 = vmatpush2.bf16.msra.mxu0 0
  %1308 = vmatprep.subr.bf16.mxu0 0
  %1309 = vmatpush2.bf16.msra.mxu0 0
  %1310 = vmatprep.subr.bf16.mxu0 0
  %1311 = vmatpush2.bf16.msra.mxu0 0
  %1312 = vmatprep.mubr.bf16.mxu0 0
  %1313 = vmatmul.mubr.bf16.gmra.mxu0 %v1278
  %v1314 = vpop.f32.mrf.mxu0
  %v1315 = vadd.f32 0.0, %v1314
  %v1316 = vpop.f32.mrf.mxu0
  %v1317 = vpop.f32.mrf.mxu0
  %v1318 = vpop.f32.mrf.mxu0
  %1319 = vdwg.mxu0
  %v1320 = vadd.f32 %v938, %v1315
  %v1321 = vxor.u32 %v1320, 2147483648
  %v1322 = vmul.f32 %v1321, 1.442695
  %v1323 = vpow.pop %v1322
  %v1324 = vadd.f32 %v1323, 1.0
  %v1325 = vrcp.pop %v1324
  %v1326 = vmul.f32 1.0, %v1325
  %v1327 = vadd.f32 %v1315, %v1017
  %1329 = vrot.lane.b32.xlu0 %v1327, 64
  %v1330 = vpop.permute.xlu0 %1329
  %v1332 = vmul.f32 %v1326, %v1330
  %1334 = vrot.lane.b32.xlu0 %v1332, 64
  %v1335 = vpop.permute.xlu0 %1334
  %v1337 = vadd.f32 %v938, %v1335
  %v1338 = vtanh.pop %v1337
  %v1339 = vsub.f32 %v1272, %v1338
  %1341 = vrot.lane.b32.xlu0 %v1339, 96
  %v1342 = vpop.permute.xlu0 %1341
  %v1344 = vmul.f32 %v1326, %v1342
  %1346 = vrot.lane.b32.xlu0 %v1344, 32
  %v1347 = vpop.permute.xlu0 %1346
  %v1349 = vadd.f32 %v1338, %v1347
  %v1350 = vpack.c.bf16 %v1349, %v1349
  %1352 = vrot.lane.b32.xlu0 %v1350, 64
  %v1353 = vpop.permute.xlu0 %1352
  %v1355 = vsel %vm179, %v1353, 0
  %1357 = vmatprep.subr.bf16.mxu0 0
  %1358 = vmatpush1.bf16.msra.mxu0 0
  %1359 = vmatprep.subr.bf16.mxu0 0
  %1360 = vmatpush1.bf16.msra.mxu0 0
  %1361 = vmatprep.subr.bf16.mxu0 0
  %1362 = vmatpush1.bf16.msra.mxu0 0
  %1363 = vmatprep.subr.bf16.mxu0 0
  %1364 = vmatpush1.bf16.msra.mxu0 0
  %1365 = vmatprep.subr.bf16.mxu0 0
  %1366 = vmatpush1.bf16.msra.mxu0 0
  %1367 = vmatprep.subr.bf16.mxu0 0
  %1368 = vmatpush1.bf16.msra.mxu0 0
  %1369 = vmatprep.subr.bf16.mxu0 0
  %1370 = vmatpush1.bf16.msra.mxu0 %v966
  %1371 = vmatprep.subr.bf16.mxu0 0
  %1372 = vmatpush1.bf16.msra.mxu0 %v965
  %1373 = vmatprep.subr.bf16.mxu0 0
  %1374 = vmatpush2.bf16.msra.mxu0 0
  %1375 = vmatprep.subr.bf16.mxu0 0
  %1376 = vmatpush2.bf16.msra.mxu0 0
  %1377 = vmatprep.subr.bf16.mxu0 0
  %1378 = vmatpush2.bf16.msra.mxu0 0
  %1379 = vmatprep.subr.bf16.mxu0 0
  %1380 = vmatpush2.bf16.msra.mxu0 0
  %1381 = vmatprep.subr.bf16.mxu0 0
  %1382 = vmatpush2.bf16.msra.mxu0 0
  %1383 = vmatprep.subr.bf16.mxu0 0
  %1384 = vmatpush2.bf16.msra.mxu0 0
  %1385 = vmatprep.subr.bf16.mxu0 0
  %1386 = vmatpush2.bf16.msra.mxu0 0
  %1387 = vmatprep.subr.bf16.mxu0 0
  %1388 = vmatpush2.bf16.msra.mxu0 0
  %1389 = vmatprep.mubr.bf16.mxu0 0
  %1390 = vmatmul.mubr.bf16.gmra.mxu0 %v1355
  %v1391 = vpop.f32.mrf.mxu0
  %v1392 = vadd.f32 0.0, %v1391
  %v1393 = vpop.f32.mrf.mxu0
  %v1394 = vpop.f32.mrf.mxu0
  %v1395 = vpop.f32.mrf.mxu0
  %1396 = vdwg.mxu0
  %v1397 = vadd.f32 %v941, %v1392
  %v1398 = vxor.u32 %v1397, 2147483648
  %v1399 = vmul.f32 %v1398, 1.442695
  %v1400 = vpow.pop %v1399
  %v1401 = vadd.f32 %v1400, 1.0
  %v1402 = vrcp.pop %v1401
  %v1403 = vmul.f32 1.0, %v1402
  %v1404 = vadd.f32 %v1392, %v1017
  %1406 = vrot.lane.b32.xlu0 %v1404, 64
  %v1407 = vpop.permute.xlu0 %1406
  %v1409 = vmul.f32 %v1403, %v1407
  %1411 = vrot.lane.b32.xlu0 %v1409, 64
  %v1412 = vpop.permute.xlu0 %1411
  %v1414 = vadd.f32 %v941, %v1412
  %v1415 = vtanh.pop %v1414
  %v1416 = vsub.f32 %v1349, %v1415
  %1418 = vrot.lane.b32.xlu0 %v1416, 96
  %v1419 = vpop.permute.xlu0 %1418
  %v1421 = vmul.f32 %v1403, %v1419
  %1423 = vrot.lane.b32.xlu0 %v1421, 32
  %v1424 = vpop.permute.xlu0 %1423
  %v1426 = vadd.f32 %v1415, %v1424
  %v1427 = vpack.c.bf16 %v1426, %v1426
  %1429 = vrot.lane.b32.xlu0 %v1427, 64
  %v1430 = vpop.permute.xlu0 %1429
  %v1432 = vsel %vm179, %v1430, 0
  %1434 = vmatprep.subr.bf16.mxu0 0
  %1435 = vmatpush1.bf16.msra.mxu0 0
  %1436 = vmatprep.subr.bf16.mxu0 0
  %1437 = vmatpush1.bf16.msra.mxu0 0
  %1438 = vmatprep.subr.bf16.mxu0 0
  %1439 = vmatpush1.bf16.msra.mxu0 0
  %1440 = vmatprep.subr.bf16.mxu0 0
  %1441 = vmatpush1.bf16.msra.mxu0 0
  %1442 = vmatprep.subr.bf16.mxu0 0
  %1443 = vmatpush1.bf16.msra.mxu0 0
  %1444 = vmatprep.subr.bf16.mxu0 0
  %1445 = vmatpush1.bf16.msra.mxu0 0
  %1446 = vmatprep.subr.bf16.mxu0 0
  %1447 = vmatpush1.bf16.msra.mxu0 %v966
  %1448 = vmatprep.subr.bf16.mxu0 0
  %1449 = vmatpush1.bf16.msra.mxu0 %v965
  %1450 = vmatprep.subr.bf16.mxu0 0
  %1451 = vmatpush2.bf16.msra.mxu0 0
  %1452 = vmatprep.subr.bf16.mxu0 0
  %1453 = vmatpush2.bf16.msra.mxu0 0
  %1454 = vmatprep.subr.bf16.mxu0 0
  %1455 = vmatpush2.bf16.msra.mxu0 0
  %1456 = vmatprep.subr.bf16.mxu0 0
  %1457 = vmatpush2.bf16.msra.mxu0 0
  %1458 = vmatprep.subr.bf16.mxu0 0
  %1459 = vmatpush2.bf16.msra.mxu0 0
  %1460 = vmatprep.subr.bf16.mxu0 0
  %1461 = vmatpush2.bf16.msra.mxu0 0
  %1462 = vmatprep.subr.bf16.mxu0 0
  %1463 = vmatpush2.bf16.msra.mxu0 0
  %1464 = vmatprep.subr.bf16.mxu0 0
  %1465 = vmatpush2.bf16.msra.mxu0 0
  %1466 = vmatprep.mubr.bf16.mxu0 0
  %1467 = vmatmul.mubr.bf16.gmra.mxu0 %v1432
  %v1468 = vpop.f32.mrf.mxu0
  %v1469 = vadd.f32 0.0, %v1468
  %v1470 = vpop.f32.mrf.mxu0
  %v1471 = vpop.f32.mrf.mxu0
  %v1472 = vpop.f32.mrf.mxu0
  %1473 = vdwg.mxu0
  %v1474 = vadd.f32 %v946, %v1469
  %v1475 = vxor.u32 %v1474, 2147483648
  %v1476 = vmul.f32 %v1475, 1.442695
  %v1477 = vpow.pop %v1476
  %v1478 = vadd.f32 %v1477, 1.0
  %v1479 = vrcp.pop %v1478
  %v1480 = vmul.f32 1.0, %v1479
  %v1481 = vadd.f32 %v1469, %v1017
  %1483 = vrot.lane.b32.xlu0 %v1481, 64
  %v1484 = vpop.permute.xlu0 %1483
  %v1486 = vmul.f32 %v1480, %v1484
  %1488 = vrot.lane.b32.xlu0 %v1486, 64
  %v1489 = vpop.permute.xlu0 %1488
  %v1491 = vadd.f32 %v946, %v1489
  %v1492 = vtanh.pop %v1491
  %v1493 = vsub.f32 %v1426, %v1492
  %1495 = vrot.lane.b32.xlu0 %v1493, 96
  %v1496 = vpop.permute.xlu0 %1495
  %v1498 = vmul.f32 %v1480, %v1496
  %1500 = vrot.lane.b32.xlu0 %v1498, 32
  %v1501 = vpop.permute.xlu0 %1500
  %v1503 = vadd.f32 %v1492, %v1501
  %v1504 = vpack.c.bf16 %v1503, %v1503
  %1506 = vrot.lane.b32.xlu0 %v1504, 64
  %v1507 = vpop.permute.xlu0 %1506
  %v1509 = vsel %vm179, %v1507, 0
  %1511 = vmatprep.subr.bf16.mxu0 0
  %1512 = vmatpush1.bf16.msra.mxu0 0
  %1513 = vmatprep.subr.bf16.mxu0 0
  %1514 = vmatpush1.bf16.msra.mxu0 0
  %1515 = vmatprep.subr.bf16.mxu0 0
  %1516 = vmatpush1.bf16.msra.mxu0 0
  %1517 = vmatprep.subr.bf16.mxu0 0
  %1518 = vmatpush1.bf16.msra.mxu0 0
  %1519 = vmatprep.subr.bf16.mxu0 0
  %1520 = vmatpush1.bf16.msra.mxu0 0
  %1521 = vmatprep.subr.bf16.mxu0 0
  %1522 = vmatpush1.bf16.msra.mxu0 0
  %1523 = vmatprep.subr.bf16.mxu0 0
  %1524 = vmatpush1.bf16.msra.mxu0 %v966
  %1525 = vmatprep.subr.bf16.mxu0 0
  %1526 = vmatpush1.bf16.msra.mxu0 %v965
  %1527 = vmatprep.subr.bf16.mxu0 0
  %1528 = vmatpush2.bf16.msra.mxu0 0
  %1529 = vmatprep.subr.bf16.mxu0 0
  %1530 = vmatpush2.bf16.msra.mxu0 0
  %1531 = vmatprep.subr.bf16.mxu0 0
  %1532 = vmatpush2.bf16.msra.mxu0 0
  %1533 = vmatprep.subr.bf16.mxu0 0
  %1534 = vmatpush2.bf16.msra.mxu0 0
  %1535 = vmatprep.subr.bf16.mxu0 0
  %1536 = vmatpush2.bf16.msra.mxu0 0
  %1537 = vmatprep.subr.bf16.mxu0 0
  %1538 = vmatpush2.bf16.msra.mxu0 0
  %1539 = vmatprep.subr.bf16.mxu0 0
  %1540 = vmatpush2.bf16.msra.mxu0 0
  %1541 = vmatprep.subr.bf16.mxu0 0
  %1542 = vmatpush2.bf16.msra.mxu0 0
  %1543 = vmatprep.mubr.bf16.mxu0 0
  %1544 = vmatmul.mubr.bf16.gmra.mxu0 %v1509
  %v1545 = vpop.f32.mrf.mxu0
  %v1546 = vadd.f32 0.0, %v1545
  %v1547 = vpop.f32.mrf.mxu0
  %v1548 = vpop.f32.mrf.mxu0
  %v1549 = vpop.f32.mrf.mxu0
  %1550 = vdwg.mxu0
  %v1551 = vadd.f32 %v949, %v1546
  %v1552 = vxor.u32 %v1551, 2147483648
  %v1553 = vmul.f32 %v1552, 1.442695
  %v1554 = vpow.pop %v1553
  %v1555 = vadd.f32 %v1554, 1.0
  %v1556 = vrcp.pop %v1555
  %v1557 = vmul.f32 1.0, %v1556
  %v1558 = vadd.f32 %v1546, %v1017
  %1560 = vrot.lane.b32.xlu0 %v1558, 64
  %v1561 = vpop.permute.xlu0 %1560
  %v1563 = vmul.f32 %v1557, %v1561
  %1565 = vrot.lane.b32.xlu0 %v1563, 64
  %v1566 = vpop.permute.xlu0 %1565
  %v1568 = vadd.f32 %v949, %v1566
  %v1569 = vtanh.pop %v1568
  %v1570 = vsub.f32 %v1503, %v1569
  %1572 = vrot.lane.b32.xlu0 %v1570, 96
  %v1573 = vpop.permute.xlu0 %1572
  %v1575 = vmul.f32 %v1557, %v1573
  %1577 = vrot.lane.b32.xlu0 %v1575, 32
  %v1578 = vpop.permute.xlu0 %1577
  %v1580 = vadd.f32 %v1569, %v1578
  %v1581 = vpack.c.bf16 %v1580, %v1580
  %v1582 = vld [vmem:[%s9] sm:$0xf]
  %v1583 = vld [vmem:[%s9 + $0x4] sm:$0xf]
  %v1584 = vld [vmem:[%s9 + $0x8] sm:$0xf]
  %v1585 = vld [vmem:[%s9 + $0xc] sm:$0xf]
  %v1586 = vld [vmem:[%s10] sm:$0x1]
  %v1588 = vlaneseq
  %v1589 = vshrl.u32 %v1588, 7
  %v1590 = vsub.s32 0, %v1589
  %v1591 = vrot.slane %v1586, %v1590
  %1594 = vrot.lane.b32.xlu0 %v1581, 64
  %v1595 = vpop.permute.xlu0 %1594
  %v1600 = vunpack.c.l.b16 %v1582
  %v1601 = vunpack.c.l.b16 %v1583
  %v1602 = vunpack.c.l.b16 %v1584
  %v1603 = vunpack.c.l.b16 %v1585
  %v1604 = vpack.c.b16 %v1601, %v1600
  %v1605 = vpack.c.b16 %v1603, %v1602
  %v1609 = vsel %vm179, %v1595, 0
  %1611 = vmatprep.subr.bf16.mxu0 0
  %1612 = vmatpush1.bf16.msra.mxu0 0
  %1613 = vmatprep.subr.bf16.mxu0 0
  %1614 = vmatpush1.bf16.msra.mxu0 0
  %1615 = vmatprep.subr.bf16.mxu0 0
  %1616 = vmatpush1.bf16.msra.mxu0 0
  %1617 = vmatprep.subr.bf16.mxu0 0
  %1618 = vmatpush1.bf16.msra.mxu0 0
  %1619 = vmatprep.subr.bf16.mxu0 0
  %1620 = vmatpush1.bf16.msra.mxu0 0
  %1621 = vmatprep.subr.bf16.mxu0 0
  %1622 = vmatpush1.bf16.msra.mxu0 0
  %1623 = vmatprep.subr.bf16.mxu0 0
  %1624 = vmatpush1.bf16.msra.mxu0 %v1605
  %1625 = vmatprep.subr.bf16.mxu0 0
  %1626 = vmatpush1.bf16.msra.mxu0 %v1604
  %1627 = vmatprep.subr.bf16.mxu0 0
  %1628 = vmatpush2.bf16.msra.mxu0 0
  %1629 = vmatprep.subr.bf16.mxu0 0
  %1630 = vmatpush2.bf16.msra.mxu0 0
  %1631 = vmatprep.subr.bf16.mxu0 0
  %1632 = vmatpush2.bf16.msra.mxu0 0
  %1633 = vmatprep.subr.bf16.mxu0 0
  %1634 = vmatpush2.bf16.msra.mxu0 0
  %1635 = vmatprep.subr.bf16.mxu0 0
  %1636 = vmatpush2.bf16.msra.mxu0 0
  %1637 = vmatprep.subr.bf16.mxu0 0
  %1638 = vmatpush2.bf16.msra.mxu0 0
  %1639 = vmatprep.subr.bf16.mxu0 0
  %1640 = vmatpush2.bf16.msra.mxu0 0
  %1641 = vmatprep.subr.bf16.mxu0 0
  %1642 = vmatpush2.bf16.msra.mxu0 0
  %1643 = vmatprep.mubr.bf16.mxu0 0
  %1644 = vmatmul.mubr.bf16.gmra.mxu0 %v1609
  %v1645 = vpop.f32.mrf.mxu0
  %v1646 = vadd.f32 %v1591, %v1645
  %v1647 = vpop.f32.mrf.mxu0
  %v1648 = vpop.f32.mrf.mxu0
  %v1649 = vpop.f32.mrf.mxu0
  %1650 = vdwg.mxu0
  %1651 = vst.msk [vmem:[%s11] sm:$0xff] %vm80, %v1646
  // Predicated region
  $region46: #{gru_model_forward.1} parent=0 // pred_check
    _
  $region47: #{gru_model_forward.1} parent=0 // pred_check_branch
    %1653 = sbr.rel (0) target = $region49
  $region48: #{gru_model_forward.1} parent=0 // pred_region
    _
  $region49: #{gru_model_forward.1} parent=0 // pred_fallthru
    _
  // Predicated region
  $region50: #{gru_model_forward.1} parent=0 // pred_check
    _
  $region51: #{gru_model_forward.1} parent=0 // pred_check_branch
    %1655 = sbr.rel (0) target = $region53
  $region52: #{gru_model_forward.1} parent=0 // pred_region
    _
  $region53: #{gru_model_forward.1} parent=0 // pred_fallthru
    _

</llo_original>
